<compile_context>
chip_gen: v6e
topology: v6e:2x2x1
jax: 0.10.0
libtpu: 0.0.40
codegen_flags: <defaults>
</compile_context>

<pallas_src>
import functools

import numpy as np

import jax
import jax.numpy as jnp
from jax.experimental import pallas as pl
from jax.experimental.pallas import tpu as pltpu

# ---- problem sizes (small, consistent with the module) ----
H = 32     # hidden_size
B = 2      # batch
NB = 4     # number of blocks (len(blocks))
S = 8      # encoder sequence length per block
V = 64     # output_size (vocab)
L = 2      # n_layers (LAYER_DEPTH)

# packed per-step output slab layout (rows x 128 lanes):
#   rows 0..B-1        lanes 0..V-1      : output (log-probs + log pgen)
#   rows 0..B-1        lane  V           : pgen
#   rows 2..2+L*B-1    lanes 0..H-1      : new hidden (layer-major)
#   rows 2+L*B..+B-1   lanes 0..H-1      : context
#   rows 0..B*NB-1     lanes 96..96+S-1  : attention weights
SLAB_ROWS = 8
SLAB_LANES = 128
ATTN_LANE0 = 96


def _gru_gates(g, h_prev, hs):
    """g has 4H columns [r | z | n_x | n_h] (biases already added)."""
    rz = jax.nn.sigmoid(g[:, :2 * hs])
    r = rz[:, :hs]
    z = rz[:, hs:2 * hs]
    n = jnp.tanh(g[:, 2 * hs:3 * hs] + r * g[:, 3 * hs:4 * hs])
    return (1.0 - z) * n + z * h_prev


def _decoder_kernel(ids_ref,
                    hid0_ref, enc_ref, wsel_ref, rep_ref, emb_ref, wa_ref,
                    wfe0_ref, wfc0_ref, wfh0_ref, bf0_ref,
                    wfx1_ref, wfh1_ref, bf1_ref,
                    whde_ref, whdo_ref, whdc_ref, bhd_ref,
                    slab_ref,
                    h_state,
                    *, hs, n_layers, batch, vocab, n_blocks, seq):
    t = pl.program_id(0)
    bn = batch * n_blocks

    # ---- step 0: load initial hidden into the carried VMEM state ----
    @pl.when(t == 0)
    def _():
        h_state[...] = hid0_ref[...]

    # read previous hidden into locals first (no read-after-overwrite hazards later)
    h_prev = [h_state[l] for l in range(n_layers)]                     # each (B, H)
    hid_last = h_prev[n_layers - 1]

    # deterministic padding for the packed output slab (one full-vreg store)
    slab_ref[0] = jnp.zeros((SLAB_ROWS, SLAB_LANES), jnp.float32)

    # ---- embedding gather (scalar-prefetched ids -> dynamic VMEM row loads) ----
    rows = []
    for b in range(batch):
        tok = ids_ref[t, b]
        rows.append(emb_ref[pl.ds(tok, 1), :])
    embedded = jnp.concatenate(rows, axis=0)                           # (B, H)
    # TODO(synk): nn.Dropout(p=0.1) on the embedding skipped (eval semantics).

    enc = enc_ref[...]                                                 # (BN, S, H)

    # ---- attention (bias term dropped: constant over S -> softmax-invariant) ----
    v = jnp.dot(hid_last, wa_ref[...], preferred_element_type=jnp.float32)   # (B, H)
    v_rep = jnp.dot(rep_ref[...], v, preferred_element_type=jnp.float32)     # (BN, H)
    score = jnp.sum(v_rep[:, None, :] * enc, axis=-1)                        # (BN, S)
    m = jnp.max(score, axis=1, keepdims=True)
    e = jnp.exp(score - m)
    attn = e / jnp.sum(e, axis=1, keepdims=True)                             # exact softmax
    slab_ref[0, 0:bn, ATTN_LANE0:ATTN_LANE0 + seq] = attn

    # block context + (view-selector * baw) contraction folded into one matmul
    block_ctx = jnp.sum(attn[:, :, None] * enc, axis=1)                      # (BN, H)
    ctx = jnp.dot(wsel_ref[...], block_ctx, preferred_element_type=jnp.float32)  # (B, H)
    ctx_row = 2 + n_layers * batch
    slab_ref[0, ctx_row:ctx_row + batch, 0:hs] = ctx

    # ---- 2-layer GRU, split-weight accumulation (no lane concats) ----
    g0 = (jnp.dot(embedded, wfe0_ref[...], preferred_element_type=jnp.float32)
          + jnp.dot(ctx, wfc0_ref[...], preferred_element_type=jnp.float32)
          + jnp.dot(h_prev[0], wfh0_ref[...], preferred_element_type=jnp.float32)
          + bf0_ref[...])
    h0_new = _gru_gates(g0, h_prev[0], hs)
    g1 = (jnp.dot(h0_new, wfx1_ref[...], preferred_element_type=jnp.float32)
          + jnp.dot(h_prev[1], wfh1_ref[...], preferred_element_type=jnp.float32)
          + bf1_ref[...])
    h1_new = _gru_gates(g1, h_prev[1], hs)
    # TODO(synk): inter-layer GRU dropout (p=0.1) skipped (eval semantics).

    h_state[0] = h0_new
    h_state[1] = h1_new
    slab_ref[0, 2:2 + batch, 0:hs] = h0_new
    slab_ref[0, 2 + batch:2 + 2 * batch, 0:hs] = h1_new
    h_top = h1_new

    # ---- fused heads: one (B, 128) matmul = [V logits | pgen logit | pad] ----
    heads = (jnp.dot(embedded, whde_ref[...], preferred_element_type=jnp.float32)
             + jnp.dot(h_top, whdo_ref[...], preferred_element_type=jnp.float32)
             + jnp.dot(ctx, whdc_ref[...], preferred_element_type=jnp.float32)
             + bhd_ref[...])                                           # (B, 128)
    logits = heads[:, :vocab]
    pgen = jax.nn.sigmoid(heads[:, vocab:vocab + 1])                   # (B, 1)
    lmax = jnp.max(logits, axis=1, keepdims=True)
    shifted = logits - lmax
    lse = jnp.log(jnp.sum(jnp.exp(shifted), axis=1, keepdims=True))
    outp = shifted - lse + jnp.log(pgen)                               # (B, V)

    slab_ref[0, 0:batch, 0:vocab] = outp
    slab_ref[0, 0:batch, vocab:vocab + 1] = pgen


def _pack_gru_split(w_ih, w_hh, b_ih, b_hh, hs):
    """Split/pre-transposed torch GRU layer weights.

    Returns wx (in, 4H) with columns [r | z | n_x | 0], wh (H, 4H) with [r | z | 0 | n_h],
    and bias bf (1, 4H) = [b_ir+b_hr | b_iz+b_hz | b_in | b_hn].
    """
    in_dim = w_ih.shape[1]
    wi = w_ih.T.astype(jnp.float32)                                    # (in, 3H)
    wh = w_hh.T.astype(jnp.float32)                                    # (H, 3H)
    wx = jnp.concatenate(
        [wi[:, :2 * hs], wi[:, 2 * hs:], jnp.zeros((in_dim, hs), jnp.float32)], axis=1)
    whp = jnp.concatenate(
        [wh[:, :2 * hs], jnp.zeros((hs, hs), jnp.float32), wh[:, 2 * hs:]], axis=1)
    bf = jnp.concatenate(
        [b_ih[:2 * hs] + b_hh[:2 * hs], b_ih[2 * hs:], b_hh[2 * hs:]]
    ).astype(jnp.float32).reshape(1, 4 * hs)
    return wx, whp, bf


def _pack_heads(w_out, b_out, w_pgen, b_pgen, hs, vocab, width):
    """Fused output/pgen head: rows [emb(H) | out(H) | ctx(H)], cols [V logits | pgen | pad]."""
    w_out_t = w_out.T.astype(jnp.float32)                              # (2H, V)
    w_pg = w_pgen.reshape(-1).astype(jnp.float32)                      # (3H,)
    pad = jnp.zeros((hs, width - vocab - 1), jnp.float32)

    def blk(logit_rows, pgen_rows):
        return jnp.concatenate([logit_rows, pgen_rows[:, None], pad], axis=1)

    whd_e = blk(jnp.zeros((hs, vocab), jnp.float32), w_pg[:hs])
    whd_o = blk(w_out_t[:hs], w_pg[hs:2 * hs])
    whd_c = blk(w_out_t[hs:], w_pg[2 * hs:])
    bhd = jnp.concatenate([b_out.astype(jnp.float32),
                           b_pgen.reshape(1).astype(jnp.float32),
                           jnp.zeros((width - vocab - 1,), jnp.float32)]).reshape(1, width)
    return whd_e, whd_o, whd_c, bhd


def local_attn_decoder_steps(ids_steps, hidden, block_attn_weights, enc_out, params,
                             *, n_blocks):
    """Run T decode steps in ONE pallas_call (grid=(T,), weights VMEM-resident,
    hidden carried in VMEM scratch). Returns per-step (output, new_hidden, context,
    attn_weights, pgen), each stacked on a leading T axis."""
    T, batch = ids_steps.shape
    n_layers, _, hs = hidden.shape
    vocab, _ = params['embedding'].shape
    bn_enc, seq, _ = enc_out.shape
    bn = batch * n_blocks
    assert n_layers == 2 and bn_enc == bn
    assert 2 + n_layers * batch + batch <= SLAB_ROWS and bn <= SLAB_ROWS
    assert vocab + 1 <= ATTN_LANE0 and ATTN_LANE0 + seq <= SLAB_LANES

    # ---- wrapper-side packing (trace-time layout plumbing; nothing hot here) ----
    wx0, wfh0, bf0 = _pack_gru_split(params['w_ih0'], params['w_hh0'],
                                     params['b_ih0'], params['b_hh0'], hs)
    wfe0, wfc0 = wx0[:hs], wx0[hs:]
    wfx1, wfh1, bf1 = _pack_gru_split(params['w_ih1'], params['w_hh1'],
                                      params['b_ih1'], params['b_hh1'], hs)
    whd_e, whd_o, whd_c, bhd = _pack_heads(params['w_out'], params['b_out'],
                                           params['w_pgen'], params['b_pgen'],
                                           hs, vocab, SLAB_LANES)

    # constant selection matrices; baw contraction folded into one (B, BN) matrix
    rep_np = np.zeros((bn, batch), np.float32)
    rep_np[np.arange(bn), np.arange(bn) % batch] = 1.0                 # torch .repeat ordering
    mask_np = np.zeros((batch, bn), np.float32)
    mask_np[np.arange(bn) // n_blocks, np.arange(bn)] = 1.0            # torch .view ordering
    wsel = jnp.asarray(mask_np) * block_attn_weights.reshape(1, bn)    # (B, BN)

    tensor_inputs = (hidden.astype(jnp.float32), enc_out.astype(jnp.float32),
                     wsel, jnp.asarray(rep_np),
                     params['embedding'].astype(jnp.float32),
                     params['w_attn'].astype(jnp.float32),
                     wfe0, wfc0, wfh0, bf0, wfx1, wfh1, bf1,
                     whd_e, whd_o, whd_c, bhd)

    def const_spec(shape):
        nd = len(shape)
        return pl.BlockSpec(shape, lambda t, ids, _nd=nd: (0,) * _nd)

    in_specs = [const_spec(x.shape) for x in tensor_inputs]
    out_spec = pl.BlockSpec((1, SLAB_ROWS, SLAB_LANES), lambda t, ids: (t, 0, 0))

    kernel = functools.partial(_decoder_kernel, hs=hs, n_layers=n_layers, batch=batch,
                               vocab=vocab, n_blocks=n_blocks, seq=seq)

    slab = pl.pallas_call(
        kernel,
        out_shape=jax.ShapeDtypeStruct((T, SLAB_ROWS, SLAB_LANES), jnp.float32),
        grid_spec=pltpu.PrefetchScalarGridSpec(
            num_scalar_prefetch=1,
            grid=(T,),
            in_specs=in_specs,
            out_specs=out_spec,
            scratch_shapes=[pltpu.VMEM((n_layers, batch, hs), jnp.float32)]),
        compiler_params=pltpu.CompilerParams(
            # the timestep axis carries the GRU recurrence -> must stay sequential
            dimension_semantics=("arbitrary",)),
    )(ids_steps.astype(jnp.int32), *tensor_inputs)

    # ---- unpack the lane-dense slab (cheap wrapper slices) ----
    out = slab[:, 0:batch, 0:vocab]                                    # (T, B, V)
    pgen = slab[:, 0:batch, vocab:vocab + 1]                           # (T, B, 1)
    nh = slab[:, 2:2 + n_layers * batch, 0:hs].reshape(T, n_layers, batch, hs)
    coff = 2 + n_layers * batch
    ctx = slab[:, coff:coff + batch, 0:hs]                             # (T, B, H)
    attn = slab[:, 0:bn, ATTN_LANE0:ATTN_LANE0 + seq][:, :, None, :]   # (T, BN, 1, S)
    return out, nh, ctx, attn, pgen


def local_attn_decoder(ids, hidden, block_attn_weights, enc_out, params, *, n_blocks):
    """Single decoder step — same interface/semantics as LocalAttnDecoderRNN.forward."""
    out, nh, ctx, attn, pgen = local_attn_decoder_steps(
        ids.reshape(1, -1), hidden, block_attn_weights, enc_out, params,
        n_blocks=n_blocks)
    return out[0], nh[0], ctx[0], attn[0], pgen[0]


def _reference(ids, hidden, baw, enc, p, *, n_blocks):
    """Pure-JAX reference mirroring the PyTorch forward (eval mode, copy=True)."""
    hs = hidden.shape[-1]
    batch = ids.shape[0]
    embedded = p['embedding'][ids]                                     # (B, H)
    hid = hidden[-1]                                                   # (B, H)
    hid_rep = jnp.tile(hid, (n_blocks, 1))                             # (B*NB, H)
    energy = jnp.einsum('nsh,kh->nsk', enc, p['w_attn']) + p['b_attn']
    score = jnp.einsum('nk,nsk->ns', hid_rep, energy)
    attn = jax.nn.softmax(score, axis=1)                               # (B*NB, S)
    block_ctx = jnp.einsum('ns,nsh->nh', attn, enc).reshape(batch, n_blocks, hs)
    ctx = jnp.einsum('bk,bkh->bh', baw[:, 0, :], block_ctx)            # (B, H)
    x = jnp.concatenate([embedded, ctx], axis=1)

    def cell(x, h, wih, whh, bih, bhh):
        gi = x @ wih.T + bih
        gh = h @ whh.T + bhh
        r = jax.nn.sigmoid(gi[:, :hs] + gh[:, :hs])
        z = jax.nn.sigmoid(gi[:, hs:2 * hs] + gh[:, hs:2 * hs])
        n = jnp.tanh(gi[:, 2 * hs:] + r * gh[:, 2 * hs:])
        return (1 - z) * n + z * h

    h0 = cell(x, hidden[0], p['w_ih0'], p['w_hh0'], p['b_ih0'], p['b_hh0'])
    h1 = cell(h0, hidden[1], p['w_ih1'], p['w_hh1'], p['b_ih1'], p['b_hh1'])
    nh = jnp.stack([h0, h1], axis=0)
    pgen = jax.nn.sigmoid(
        jnp.concatenate([embedded, h1, ctx], axis=1) @ p['w_pgen'].T + p['b_pgen'])
    logits = jnp.concatenate([h1, ctx], axis=1) @ p['w_out'].T + p['b_out']
    out = jax.nn.log_softmax(logits, axis=1) + jnp.log(pgen)
    return out, nh, ctx, attn[:, None, :], pgen


if __name__ == "__main__":
    key = jax.random.PRNGKey(0)
    ks = jax.random.split(key, 21)

    def u(k, shape, scale):
        return jax.random.uniform(k, shape, jnp.float32, -scale, scale)

    s_h = 1.0 / float(np.sqrt(H))
    s_2h = 1.0 / float(np.sqrt(2 * H))
    s_3h = 1.0 / float(np.sqrt(3 * H))

    params = {
        'embedding': jax.random.normal(ks[0], (V, H), jnp.float32),
        'w_attn': u(ks[1], (H, H), s_h), 'b_attn': u(ks[2], (H,), s_h),
        # GRU layer 0: input size 2H
        'w_ih0': u(ks[3], (3 * H, 2 * H), s_h), 'w_hh0': u(ks[4], (3 * H, H), s_h),
        'b_ih0': u(ks[5], (3 * H,), s_h), 'b_hh0': u(ks[6], (3 * H,), s_h),
        # GRU layer 1: input size H
        'w_ih1': u(ks[7], (3 * H, H), s_h), 'w_hh1': u(ks[8], (3 * H, H), s_h),
        'b_ih1': u(ks[9], (3 * H,), s_h), 'b_hh1': u(ks[10], (3 * H,), s_h),
        # PGenLayer: Linear(3H -> 1)
        'w_pgen': u(ks[11], (1, 3 * H), s_3h), 'b_pgen': u(ks[12], (1,), s_3h),
        # output head: Linear(2H -> V)
        'w_out': u(ks[13], (V, 2 * H), s_2h), 'b_out': u(ks[14], (V,), s_2h),
    }

    ids = jax.random.randint(ks[15], (B,), 0, V, dtype=jnp.int32)
    hidden = jax.random.normal(ks[16], (L, B, H), jnp.float32)
    baw = jax.nn.softmax(jax.random.normal(ks[17], (B, 1, NB), jnp.float32), axis=-1)
    enc = jax.random.normal(ks[18], (B * NB, S, H), jnp.float32)

    # ---- single-step check (module-equivalent interface) ----
    fn1 = jax.jit(functools.partial(local_attn_decoder, n_blocks=NB))
    got1 = jax.block_until_ready(fn1(ids, hidden, baw, enc, params))
    ref1 = _reference(ids, hidden, baw, enc, params, n_blocks=NB)
    assert got1[0].shape == (B, V) and got1[1].shape == (L, B, H)
    assert got1[2].shape == (B, H) and got1[3].shape == (B * NB, 1, S)
    assert got1[4].shape == (B, 1)
    for g, w in zip(got1, ref1):
        err = float(jnp.max(jnp.abs(g - w)))
        assert jnp.allclose(g, w, rtol=1e-2, atol=1e-2), err

    # ---- multi-step check: timestep loop internalized into the kernel grid ----
    T = 4
    ids_T = jax.random.randint(ks[19], (T, B), 0, V, dtype=jnp.int32)
    fnT = jax.jit(functools.partial(local_attn_decoder_steps, n_blocks=NB))
    gotT = jax.block_until_ready(fnT(ids_T, hidden, baw, enc, params))
    hid = hidden
    for t in range(T):
        refs = _reference(ids_T[t], hid, baw, enc, params, n_blocks=NB)
        hid = refs[1]
        step = (gotT[0][t], gotT[1][t], gotT[2][t], gotT[3][t], gotT[4][t])
        for g, w in zip(step, refs):
            err = float(jnp.max(jnp.abs(g - w)))
            assert jnp.allclose(g, w, rtol=1e-2, atol=1e-2), (t, err)

    print("KERNEL_OK")
</pallas_src>

<mosaic_0001>
module attributes {stable_mosaic.version = 11 : i64} {
  func.func @_decoder_kernel(%arg0: i32, %arg1: memref<1x2xi32, #tpu.memory_space<smem>>, %arg2: memref<2x2x32xf32, #tpu.memory_space<vmem>>, %arg3: memref<8x8x32xf32, #tpu.memory_space<vmem>>, %arg4: memref<2x8xf32, #tpu.memory_space<vmem>>, %arg5: memref<8x2xf32, #tpu.memory_space<vmem>>, %arg6: memref<64x32xf32, #tpu.memory_space<vmem>>, %arg7: memref<32x32xf32, #tpu.memory_space<vmem>>, %arg8: memref<32x128xf32, #tpu.memory_space<vmem>>, %arg9: memref<32x128xf32, #tpu.memory_space<vmem>>, %arg10: memref<32x128xf32, #tpu.memory_space<vmem>>, %arg11: memref<1x128xf32, #tpu.memory_space<vmem>>, %arg12: memref<32x128xf32, #tpu.memory_space<vmem>>, %arg13: memref<32x128xf32, #tpu.memory_space<vmem>>, %arg14: memref<1x128xf32, #tpu.memory_space<vmem>>, %arg15: memref<32x128xf32, #tpu.memory_space<vmem>>, %arg16: memref<32x128xf32, #tpu.memory_space<vmem>>, %arg17: memref<32x128xf32, #tpu.memory_space<vmem>>, %arg18: memref<1x128xf32, #tpu.memory_space<vmem>>, %arg19: memref<1x8x128xf32, #tpu.memory_space<vmem>>, %arg20: memref<2x2x32xf32, #tpu.memory_space<vmem>>) attributes {dimension_semantics = [#tpu.dimension_semantics<arbitrary>], iteration_bounds = array<i64: 1>, scalar_prefetch = 1 : i64, scratch_operands = 1 : i64, tpu.core_type = #tpu.core_type<tc>, window_params = [{pipeline_mode = #tpu.pipeline_mode<synchronous>, transform_indices = @transform_0, window_bounds = array<i64: 2, 2, 32>}, {pipeline_mode = #tpu.pipeline_mode<synchronous>, transform_indices = @transform_1, window_bounds = array<i64: 8, 8, 32>}, {pipeline_mode = #tpu.pipeline_mode<synchronous>, transform_indices = @transform_2, window_bounds = array<i64: 2, 8>}, {pipeline_mode = #tpu.pipeline_mode<synchronous>, transform_indices = @transform_3, window_bounds = array<i64: 8, 2>}, {pipeline_mode = #tpu.pipeline_mode<synchronous>, transform_indices = @transform_4, window_bounds = array<i64: 64, 32>}, {pipeline_mode = #tpu.pipeline_mode<synchronous>, transform_indices = @transform_5, window_bounds = array<i64: 32, 32>}, {pipeline_mode = #tpu.pipeline_mode<synchronous>, transform_indices = @transform_6, window_bounds = array<i64: 32, 128>}, {pipeline_mode = #tpu.pipeline_mode<synchronous>, transform_indices = @transform_7, window_bounds = array<i64: 32, 128>}, {pipeline_mode = #tpu.pipeline_mode<synchronous>, transform_indices = @transform_8, window_bounds = array<i64: 32, 128>}, {pipeline_mode = #tpu.pipeline_mode<synchronous>, transform_indices = @transform_9, window_bounds = array<i64: 1, 128>}, {pipeline_mode = #tpu.pipeline_mode<synchronous>, transform_indices = @transform_10, window_bounds = array<i64: 32, 128>}, {pipeline_mode = #tpu.pipeline_mode<synchronous>, transform_indices = @transform_11, window_bounds = array<i64: 32, 128>}, {pipeline_mode = #tpu.pipeline_mode<synchronous>, transform_indices = @transform_12, window_bounds = array<i64: 1, 128>}, {pipeline_mode = #tpu.pipeline_mode<synchronous>, transform_indices = @transform_13, window_bounds = array<i64: 32, 128>}, {pipeline_mode = #tpu.pipeline_mode<synchronous>, transform_indices = @transform_14, window_bounds = array<i64: 32, 128>}, {pipeline_mode = #tpu.pipeline_mode<synchronous>, transform_indices = @transform_15, window_bounds = array<i64: 32, 128>}, {pipeline_mode = #tpu.pipeline_mode<synchronous>, transform_indices = @transform_16, window_bounds = array<i64: 1, 128>}, {transform_indices = @transform_17, window_bounds = array<i64: 1, 8, 128>}]} {
    %c0_i32 = arith.constant 0 : i32
    %0 = arith.cmpi eq, %arg0, %c0_i32 : i32
    %1 = arith.extui %0 : i1 to i32
    %c0_i32_0 = arith.constant 0 : i32
    %2 = arith.cmpi ne, %1, %c0_i32_0 : i32
    scf.if %2 {
      %c0_84 = arith.constant 0 : index
      %c0_85 = arith.constant 0 : index
      %c0_86 = arith.constant 0 : index
      %154 = vector.load %arg2[%c0_84, %c0_85, %c0_86] : memref<2x2x32xf32, #tpu.memory_space<vmem>>, vector<2x2x32xf32>
      %c0_87 = arith.constant 0 : index
      %c0_88 = arith.constant 0 : index
      %c0_89 = arith.constant 0 : index
      %155 = vector.load %arg20[%c0_87, %c0_88, %c0_89] : memref<2x2x32xf32, #tpu.memory_space<vmem>>, vector<2x2x32xf32>
      tpu.vector_store %arg20[%c0_87, %c0_88, %c0_89], %154 {strides = array<i32>} : memref<2x2x32xf32, #tpu.memory_space<vmem>>, vector<2x2x32xf32>,
    } else {
    }
    %c0 = arith.constant 0 : index
    %c0_1 = arith.constant 0 : index
    %c0_2 = arith.constant 0 : index
    %3 = vector.load %arg20[%c0, %c0_1, %c0_2] : memref<2x2x32xf32, #tpu.memory_space<vmem>>, vector<1x2x32xf32>
    %4 = vector.shape_cast %3 : vector<1x2x32xf32> to vector<2x32xf32>
    %c1 = arith.constant 1 : index
    %c0_3 = arith.constant 0 : index
    %c0_4 = arith.constant 0 : index
    %5 = vector.load %arg20[%c1, %c0_3, %c0_4] : memref<2x2x32xf32, #tpu.memory_space<vmem>>, vector<1x2x32xf32>
    %6 = vector.shape_cast %5 : vector<1x2x32xf32> to vector<2x32xf32>
    %cst = arith.constant 0.000000e+00 : f32
    %7 = vector.broadcast %cst : f32 to vector<8x128xf32>
    %c0_5 = arith.constant 0 : index
    %c0_6 = arith.constant 0 : index
    %c0_7 = arith.constant 0 : index
    %8 = vector.load %arg19[%c0_5, %c0_6, %c0_7] : memref<1x8x128xf32, #tpu.memory_space<vmem>>, vector<1x8x128xf32>
    %9 = vector.shape_cast %8 : vector<1x8x128xf32> to vector<8x128xf32>
    %10 = vector.shape_cast %7 : vector<8x128xf32> to vector<1x8x128xf32>
    tpu.vector_store %arg19[%c0_5, %c0_6, %c0_7], %10 {strides = array<i32>} : memref<1x8x128xf32, #tpu.memory_space<vmem>>, vector<1x8x128xf32>,
    %11 = arith.index_cast %arg0 : i32 to index
    %c0_8 = arith.constant 0 : index
    %12 = memref.load %arg1[%11, %c0_8] : memref<1x2xi32, #tpu.memory_space<smem>>
    %13 = arith.index_cast %12 : i32 to index
    %c0_9 = arith.constant 0 : index
    %14 = vector.load %arg6[%13, %c0_9] : memref<64x32xf32, #tpu.memory_space<vmem>>, vector<1x32xf32>
    %15 = arith.index_cast %arg0 : i32 to index
    %c1_10 = arith.constant 1 : index
    %16 = memref.load %arg1[%15, %c1_10] : memref<1x2xi32, #tpu.memory_space<smem>>
    %17 = arith.index_cast %16 : i32 to index
    %c0_11 = arith.constant 0 : index
    %18 = vector.load %arg6[%17, %c0_11] : memref<64x32xf32, #tpu.memory_space<vmem>>, vector<1x32xf32>
    %19 = tpu.concatenate %14, %18 in 0 : vector<1x32xf32>, vector<1x32xf32> -> vector<2x32xf32>
    %c0_12 = arith.constant 0 : index
    %c0_13 = arith.constant 0 : index
    %c0_14 = arith.constant 0 : index
    %20 = vector.load %arg3[%c0_12, %c0_13, %c0_14] : memref<8x8x32xf32, #tpu.memory_space<vmem>>, vector<8x8x32xf32>
    %c0_15 = arith.constant 0 : index
    %c0_16 = arith.constant 0 : index
    %21 = vector.load %arg7[%c0_15, %c0_16] : memref<32x32xf32, #tpu.memory_space<vmem>>, vector<32x32xf32>
    %cst_17 = arith.constant dense<0.000000e+00> : vector<2x32xf32>
    %22 = tpu.matmul %6, %21, %cst_17 {dimension_numbers = #tpu.dot_dimension_numbers<[1], [0], [0], [1], [0, 0, 1, 1], [], []>} : vector<2x32xf32>, vector<32x32xf32>, vector<2x32xf32> -> vector<2x32xf32>
    %c0_18 = arith.constant 0 : index
    %c0_19 = arith.constant 0 : index
    %23 = vector.load %arg5[%c0_18, %c0_19] : memref<8x2xf32, #tpu.memory_space<vmem>>, vector<8x2xf32>
    %cst_20 = arith.constant dense<0.000000e+00> : vector<8x32xf32>
    %24 = tpu.matmul %23, %22, %cst_20 {dimension_numbers = #tpu.dot_dimension_numbers<[1], [0], [0], [1], [0, 0, 1, 1], [], []>} : vector<8x2xf32>, vector<2x32xf32>, vector<8x32xf32> -> vector<8x32xf32>
    %25 = vector.shape_cast %24 : vector<8x32xf32> to vector<8x1x32xf32>
    %26 = vector.broadcast %25 : vector<8x1x32xf32> to vector<8x8x32xf32>
    %27 = arith.mulf %26, %20 : vector<8x8x32xf32>
    %cst_21 = arith.constant dense<0.000000e+00> : vector<8x8xf32>
    %28 = vector.multi_reduction <add>, %27, %cst_21 [2] : vector<8x8x32xf32> to vector<8x8xf32>
    %cst_22 = arith.constant dense<0xFF800000> : vector<8xf32>
    %29 = vector.multi_reduction <maximumf>, %28, %cst_22 [1] : vector<8x8xf32> to vector<8xf32>
    %30 = vector.shape_cast %29 : vector<8xf32> to vector<8x1xf32>
    %31 = vector.broadcast %30 : vector<8x1xf32> to vector<8x8xf32>
    %32 = arith.subf %28, %31 : vector<8x8xf32>
    %33 = math.exp %32 : vector<8x8xf32>
    %cst_23 = arith.constant dense<0.000000e+00> : vector<8xf32>
    %34 = vector.multi_reduction <add>, %33, %cst_23 [1] : vector<8x8xf32> to vector<8xf32>
    %35 = vector.shape_cast %34 : vector<8xf32> to vector<8x1xf32>
    %36 = vector.broadcast %35 : vector<8x1xf32> to vector<8x8xf32>
    %37 = arith.divf %33, %36 : vector<8x8xf32>
    %c0_24 = arith.constant 0 : index
    %c0_25 = arith.constant 0 : index
    %c96 = arith.constant 96 : index
    %38 = vector.load %arg19[%c0_24, %c0_25, %c96] : memref<1x8x128xf32, #tpu.memory_space<vmem>>, vector<1x8x8xf32>
    %39 = vector.shape_cast %38 : vector<1x8x8xf32> to vector<8x8xf32>
    %40 = vector.shape_cast %37 : vector<8x8xf32> to vector<1x8x8xf32>
    tpu.vector_store %arg19[%c0_24, %c0_25, %c96], %40 {strides = array<i32>} : memref<1x8x128xf32, #tpu.memory_space<vmem>>, vector<1x8x8xf32>,
    %41 = vector.shape_cast %37 : vector<8x8xf32> to vector<8x8x1xf32>
    %42 = vector.broadcast %41 : vector<8x8x1xf32> to vector<8x8x32xf32>
    %43 = arith.mulf %42, %20 : vector<8x8x32xf32>
    %cst_26 = arith.constant dense<0.000000e+00> : vector<8x32xf32>
    %44 = vector.multi_reduction <add>, %43, %cst_26 [1] : vector<8x8x32xf32> to vector<8x32xf32>
    %c0_27 = arith.constant 0 : index
    %c0_28 = arith.constant 0 : index
    %45 = vector.load %arg4[%c0_27, %c0_28] : memref<2x8xf32, #tpu.memory_space<vmem>>, vector<2x8xf32>
    %cst_29 = arith.constant dense<0.000000e+00> : vector<2x32xf32>
    %46 = tpu.matmul %45, %44, %cst_29 {dimension_numbers = #tpu.dot_dimension_numbers<[1], [0], [0], [1], [0, 0, 1, 1], [], []>} : vector<2x8xf32>, vector<8x32xf32>, vector<2x32xf32> -> vector<2x32xf32>
    %c0_30 = arith.constant 0 : index
    %c6 = arith.constant 6 : index
    %c0_31 = arith.constant 0 : index
    %47 = vector.load %arg19[%c0_30, %c6, %c0_31] : memref<1x8x128xf32, #tpu.memory_space<vmem>>, vector<1x2x32xf32>
    %48 = vector.shape_cast %47 : vector<1x2x32xf32> to vector<2x32xf32>
    %49 = vector.shape_cast %46 : vector<2x32xf32> to vector<1x2x32xf32>
    tpu.vector_store %arg19[%c0_30, %c6, %c0_31], %49 {strides = array<i32>} : memref<1x8x128xf32, #tpu.memory_space<vmem>>, vector<1x2x32xf32>,
    %c0_32 = arith.constant 0 : index
    %c0_33 = arith.constant 0 : index
    %50 = vector.load %arg8[%c0_32, %c0_33] : memref<32x128xf32, #tpu.memory_space<vmem>>, vector<32x128xf32>
    %cst_34 = arith.constant dense<0.000000e+00> : vector<2x128xf32>
    %51 = tpu.matmul %19, %50, %cst_34 {dimension_numbers = #tpu.dot_dimension_numbers<[1], [0], [0], [1], [0, 0, 1, 1], [], []>} : vector<2x32xf32>, vector<32x128xf32>, vector<2x128xf32> -> vector<2x128xf32>
    %c0_35 = arith.constant 0 : index
    %c0_36 = arith.constant 0 : index
    %52 = vector.load %arg9[%c0_35, %c0_36] : memref<32x128xf32, #tpu.memory_space<vmem>>, vector<32x128xf32>
    %cst_37 = arith.constant dense<0.000000e+00> : vector<2x128xf32>
    %53 = tpu.matmul %46, %52, %cst_37 {dimension_numbers = #tpu.dot_dimension_numbers<[1], [0], [0], [1], [0, 0, 1, 1], [], []>} : vector<2x32xf32>, vector<32x128xf32>, vector<2x128xf32> -> vector<2x128xf32>
    %54 = arith.addf %51, %53 : vector<2x128xf32>
    %c0_38 = arith.constant 0 : index
    %c0_39 = arith.constant 0 : index
    %55 = vector.load %arg10[%c0_38, %c0_39] : memref<32x128xf32, #tpu.memory_space<vmem>>, vector<32x128xf32>
    %cst_40 = arith.constant dense<0.000000e+00> : vector<2x128xf32>
    %56 = tpu.matmul %4, %55, %cst_40 {dimension_numbers = #tpu.dot_dimension_numbers<[1], [0], [0], [1], [0, 0, 1, 1], [], []>} : vector<2x32xf32>, vector<32x128xf32>, vector<2x128xf32> -> vector<2x128xf32>
    %57 = arith.addf %54, %56 : vector<2x128xf32>
    %c0_41 = arith.constant 0 : index
    %c0_42 = arith.constant 0 : index
    %58 = vector.load %arg11[%c0_41, %c0_42] : memref<1x128xf32, #tpu.memory_space<vmem>>, vector<1x128xf32>
    %59 = vector.broadcast %58 : vector<1x128xf32> to vector<2x128xf32>
    %60 = arith.addf %57, %59 : vector<2x128xf32>
    %61 = vector.extract_strided_slice %60 {offsets = [0, 0], sizes = [2, 64], strides = [1, 1]} : vector<2x128xf32> to vector<2x64xf32>
    %62 = arith.negf %61 : vector<2x64xf32>
    %63 = math.exp %62 : vector<2x64xf32>
    %cst_43 = arith.constant 1.000000e+00 : f32
    %64 = vector.broadcast %cst_43 : f32 to vector<2x64xf32>
    %65 = arith.addf %64, %63 : vector<2x64xf32>
    %66 = arith.divf %64, %65 : vector<2x64xf32>
    %67 = vector.extract_strided_slice %66 {offsets = [0, 0], sizes = [2, 32], strides = [1, 1]} : vector<2x64xf32> to vector<2x32xf32>
    %68 = vector.extract_strided_slice %66 {offsets = [0, 32], sizes = [2, 32], strides = [1, 1]} : vector<2x64xf32> to vector<2x32xf32>
    %69 = vector.extract_strided_slice %60 {offsets = [0, 64], sizes = [2, 32], strides = [1, 1]} : vector<2x128xf32> to vector<2x32xf32>
    %70 = vector.extract_strided_slice %60 {offsets = [0, 96], sizes = [2, 32], strides = [1, 1]} : vector<2x128xf32> to vector<2x32xf32>
    %71 = arith.mulf %67, %70 : vector<2x32xf32>
    %72 = arith.addf %69, %71 : vector<2x32xf32>
    %73 = math.tanh %72 : vector<2x32xf32>
    %cst_44 = arith.constant 1.000000e+00 : f32
    %74 = vector.broadcast %cst_44 : f32 to vector<2x32xf32>
    %75 = arith.subf %74, %68 : vector<2x32xf32>
    %76 = arith.mulf %75, %73 : vector<2x32xf32>
    %77 = arith.mulf %68, %4 : vector<2x32xf32>
    %78 = arith.addf %76, %77 : vector<2x32xf32>
    %c0_45 = arith.constant 0 : index
    %c0_46 = arith.constant 0 : index
    %79 = vector.load %arg12[%c0_45, %c0_46] : memref<32x128xf32, #tpu.memory_space<vmem>>, vector<32x128xf32>
    %cst_47 = arith.constant dense<0.000000e+00> : vector<2x128xf32>
    %80 = tpu.matmul %78, %79, %cst_47 {dimension_numbers = #tpu.dot_dimension_numbers<[1], [0], [0], [1], [0, 0, 1, 1], [], []>} : vector<2x32xf32>, vector<32x128xf32>, vector<2x128xf32> -> vector<2x128xf32>
    %c0_48 = arith.constant 0 : index
    %c0_49 = arith.constant 0 : index
    %81 = vector.load %arg13[%c0_48, %c0_49] : memref<32x128xf32, #tpu.memory_space<vmem>>, vector<32x128xf32>
    %cst_50 = arith.constant dense<0.000000e+00> : vector<2x128xf32>
    %82 = tpu.matmul %6, %81, %cst_50 {dimension_numbers = #tpu.dot_dimension_numbers<[1], [0], [0], [1], [0, 0, 1, 1], [], []>} : vector<2x32xf32>, vector<32x128xf32>, vector<2x128xf32> -> vector<2x128xf32>
    %83 = arith.addf %80, %82 : vector<2x128xf32>
    %c0_51 = arith.constant 0 : index
    %c0_52 = arith.constant 0 : index
    %84 = vector.load %arg14[%c0_51, %c0_52] : memref<1x128xf32, #tpu.memory_space<vmem>>, vector<1x128xf32>
    %85 = vector.broadcast %84 : vector<1x128xf32> to vector<2x128xf32>
    %86 = arith.addf %83, %85 : vector<2x128xf32>
    %87 = vector.extract_strided_slice %86 {offsets = [0, 0], sizes = [2, 64], strides = [1, 1]} : vector<2x128xf32> to vector<2x64xf32>
    %88 = arith.negf %87 : vector<2x64xf32>
    %89 = math.exp %88 : vector<2x64xf32>
    %cst_53 = arith.constant 1.000000e+00 : f32
    %90 = vector.broadcast %cst_53 : f32 to vector<2x64xf32>
    %91 = arith.addf %90, %89 : vector<2x64xf32>
    %92 = arith.divf %90, %91 : vector<2x64xf32>
    %93 = vector.extract_strided_slice %92 {offsets = [0, 0], sizes = [2, 32], strides = [1, 1]} : vector<2x64xf32> to vector<2x32xf32>
    %94 = vector.extract_strided_slice %92 {offsets = [0, 32], sizes = [2, 32], strides = [1, 1]} : vector<2x64xf32> to vector<2x32xf32>
    %95 = vector.extract_strided_slice %86 {offsets = [0, 64], sizes = [2, 32], strides = [1, 1]} : vector<2x128xf32> to vector<2x32xf32>
    %96 = vector.extract_strided_slice %86 {offsets = [0, 96], sizes = [2, 32], strides = [1, 1]} : vector<2x128xf32> to vector<2x32xf32>
    %97 = arith.mulf %93, %96 : vector<2x32xf32>
    %98 = arith.addf %95, %97 : vector<2x32xf32>
    %99 = math.tanh %98 : vector<2x32xf32>
    %cst_54 = arith.constant 1.000000e+00 : f32
    %100 = vector.broadcast %cst_54 : f32 to vector<2x32xf32>
    %101 = arith.subf %100, %94 : vector<2x32xf32>
    %102 = arith.mulf %101, %99 : vector<2x32xf32>
    %103 = arith.mulf %94, %6 : vector<2x32xf32>
    %104 = arith.addf %102, %103 : vector<2x32xf32>
    %c0_55 = arith.constant 0 : index
    %c0_56 = arith.constant 0 : index
    %c0_57 = arith.constant 0 : index
    %105 = vector.load %arg20[%c0_55, %c0_56, %c0_57] : memref<2x2x32xf32, #tpu.memory_space<vmem>>, vector<1x2x32xf32>
    %106 = vector.shape_cast %105 : vector<1x2x32xf32> to vector<2x32xf32>
    %107 = vector.shape_cast %78 : vector<2x32xf32> to vector<1x2x32xf32>
    tpu.vector_store %arg20[%c0_55, %c0_56, %c0_57], %107 {strides = array<i32>} : memref<2x2x32xf32, #tpu.memory_space<vmem>>, vector<1x2x32xf32>,
    %c1_58 = arith.constant 1 : index
    %c0_59 = arith.constant 0 : index
    %c0_60 = arith.constant 0 : index
    %108 = vector.load %arg20[%c1_58, %c0_59, %c0_60] : memref<2x2x32xf32, #tpu.memory_space<vmem>>, vector<1x2x32xf32>
    %109 = vector.shape_cast %108 : vector<1x2x32xf32> to vector<2x32xf32>
    %110 = vector.shape_cast %104 : vector<2x32xf32> to vector<1x2x32xf32>
    tpu.vector_store %arg20[%c1_58, %c0_59, %c0_60], %110 {strides = array<i32>} : memref<2x2x32xf32, #tpu.memory_space<vmem>>, vector<1x2x32xf32>,
    %c0_61 = arith.constant 0 : index
    %c2 = arith.constant 2 : index
    %c0_62 = arith.constant 0 : index
    %111 = vector.load %arg19[%c0_61, %c2, %c0_62] : memref<1x8x128xf32, #tpu.memory_space<vmem>>, vector<1x2x32xf32>
    %112 = vector.shape_cast %111 : vector<1x2x32xf32> to vector<2x32xf32>
    %113 = vector.shape_cast %78 : vector<2x32xf32> to vector<1x2x32xf32>
    tpu.vector_store %arg19[%c0_61, %c2, %c0_62], %113 {strides = array<i32>} : memref<1x8x128xf32, #tpu.memory_space<vmem>>, vector<1x2x32xf32>,
    %c0_63 = arith.constant 0 : index
    %c4 = arith.constant 4 : index
    %c0_64 = arith.constant 0 : index
    %114 = vector.load %arg19[%c0_63, %c4, %c0_64] : memref<1x8x128xf32, #tpu.memory_space<vmem>>, vector<1x2x32xf32>
    %115 = vector.shape_cast %114 : vector<1x2x32xf32> to vector<2x32xf32>
    %116 = vector.shape_cast %104 : vector<2x32xf32> to vector<1x2x32xf32>
    tpu.vector_store %arg19[%c0_63, %c4, %c0_64], %116 {strides = array<i32>} : memref<1x8x128xf32, #tpu.memory_space<vmem>>, vector<1x2x32xf32>,
    %c0_65 = arith.constant 0 : index
    %c0_66 = arith.constant 0 : index
    %117 = vector.load %arg15[%c0_65, %c0_66] : memref<32x128xf32, #tpu.memory_space<vmem>>, vector<32x128xf32>
    %cst_67 = arith.constant dense<0.000000e+00> : vector<2x128xf32>
    %118 = tpu.matmul %19, %117, %cst_67 {dimension_numbers = #tpu.dot_dimension_numbers<[1], [0], [0], [1], [0, 0, 1, 1], [], []>} : vector<2x32xf32>, vector<32x128xf32>, vector<2x128xf32> -> vector<2x128xf32>
    %c0_68 = arith.constant 0 : index
    %c0_69 = arith.constant 0 : index
    %119 = vector.load %arg16[%c0_68, %c0_69] : memref<32x128xf32, #tpu.memory_space<vmem>>, vector<32x128xf32>
    %cst_70 = arith.constant dense<0.000000e+00> : vector<2x128xf32>
    %120 = tpu.matmul %104, %119, %cst_70 {dimension_numbers = #tpu.dot_dimension_numbers<[1], [0], [0], [1], [0, 0, 1, 1], [], []>} : vector<2x32xf32>, vector<32x128xf32>, vector<2x128xf32> -> vector<2x128xf32>
    %121 = arith.addf %118, %120 : vector<2x128xf32>
    %c0_71 = arith.constant 0 : index
    %c0_72 = arith.constant 0 : index
    %122 = vector.load %arg17[%c0_71, %c0_72] : memref<32x128xf32, #tpu.memory_space<vmem>>, vector<32x128xf32>
    %cst_73 = arith.constant dense<0.000000e+00> : vector<2x128xf32>
    %123 = tpu.matmul %46, %122, %cst_73 {dimension_numbers = #tpu.dot_dimension_numbers<[1], [0], [0], [1], [0, 0, 1, 1], [], []>} : vector<2x32xf32>, vector<32x128xf32>, vector<2x128xf32> -> vector<2x128xf32>
    %124 = arith.addf %121, %123 : vector<2x128xf32>
    %c0_74 = arith.constant 0 : index
    %c0_75 = arith.constant 0 : index
    %125 = vector.load %arg18[%c0_74, %c0_75] : memref<1x128xf32, #tpu.memory_space<vmem>>, vector<1x128xf32>
    %126 = vector.broadcast %125 : vector<1x128xf32> to vector<2x128xf32>
    %127 = arith.addf %124, %126 : vector<2x128xf32>
    %128 = vector.extract_strided_slice %127 {offsets = [0, 0], sizes = [2, 64], strides = [1, 1]} : vector<2x128xf32> to vector<2x64xf32>
    %129 = vector.extract_strided_slice %127 {offsets = [0, 64], sizes = [2, 1], strides = [1, 1]} : vector<2x128xf32> to vector<2x1xf32>
    %130 = arith.negf %129 : vector<2x1xf32>
    %131 = math.exp %130 : vector<2x1xf32>
    %cst_76 = arith.constant 1.000000e+00 : f32
    %132 = vector.broadcast %cst_76 : f32 to vector<2x1xf32>
    %133 = arith.addf %132, %131 : vector<2x1xf32>
    %134 = arith.divf %132, %133 : vector<2x1xf32>
    %cst_77 = arith.constant dense<0xFF800000> : vector<2xf32>
    %135 = vector.multi_reduction <maximumf>, %128, %cst_77 [1] : vector<2x64xf32> to vector<2xf32>
    %136 = vector.shape_cast %135 : vector<2xf32> to vector<2x1xf32>
    %137 = vector.broadcast %136 : vector<2x1xf32> to vector<2x64xf32>
    %138 = arith.subf %128, %137 : vector<2x64xf32>
    %139 = math.exp %138 : vector<2x64xf32>
    %cst_78 = arith.constant dense<0.000000e+00> : vector<2xf32>
    %140 = vector.multi_reduction <add>, %139, %cst_78 [1] : vector<2x64xf32> to vector<2xf32>
    %141 = vector.shape_cast %140 : vector<2xf32> to vector<2x1xf32>
    %142 = math.log %141 : vector<2x1xf32>
    %143 = vector.broadcast %142 : vector<2x1xf32> to vector<2x64xf32>
    %144 = arith.subf %138, %143 : vector<2x64xf32>
    %145 = math.log %134 : vector<2x1xf32>
    %146 = vector.broadcast %145 : vector<2x1xf32> to vector<2x64xf32>
    %147 = arith.addf %144, %146 : vector<2x64xf32>
    %c0_79 = arith.constant 0 : index
    %c0_80 = arith.constant 0 : index
    %c0_81 = arith.constant 0 : index
    %148 = vector.load %arg19[%c0_79, %c0_80, %c0_81] : memref<1x8x128xf32, #tpu.memory_space<vmem>>, vector<1x2x64xf32>
    %149 = vector.shape_cast %148 : vector<1x2x64xf32> to vector<2x64xf32>
    %150 = vector.shape_cast %147 : vector<2x64xf32> to vector<1x2x64xf32>
    tpu.vector_store %arg19[%c0_79, %c0_80, %c0_81], %150 {strides = array<i32>} : memref<1x8x128xf32, #tpu.memory_space<vmem>>, vector<1x2x64xf32>,
    %c0_82 = arith.constant 0 : index
    %c0_83 = arith.constant 0 : index
    %c64 = arith.constant 64 : index
    %151 = vector.load %arg19[%c0_82, %c0_83, %c64] : memref<1x8x128xf32, #tpu.memory_space<vmem>>, vector<1x2x1xf32>
    %152 = vector.shape_cast %151 : vector<1x2x1xf32> to vector<2x1xf32>
    %153 = vector.shape_cast %134 : vector<2x1xf32> to vector<1x2x1xf32>
    tpu.vector_store %arg19[%c0_82, %c0_83, %c64], %153 {strides = array<i32>} : memref<1x8x128xf32, #tpu.memory_space<vmem>>, vector<1x2x1xf32>,
    return
  }
  func.func @transform_0(%arg0: i32, %arg1: memref<1x2xi32, #tpu.memory_space<smem>>) -> (i32, i32, i32) {
    %c0_i32 = arith.constant 0 : i32
    %c0_i32_0 = arith.constant 0 : i32
    %c0_i32_1 = arith.constant 0 : i32
    %c0_i32_2 = arith.constant 0 : i32
    return %c0_i32, %c0_i32_0, %c0_i32_1 : i32, i32, i32
  }
  func.func @transform_1(%arg0: i32, %arg1: memref<1x2xi32, #tpu.memory_space<smem>>) -> (i32, i32, i32) {
    %c0_i32 = arith.constant 0 : i32
    %c0_i32_0 = arith.constant 0 : i32
    %c0_i32_1 = arith.constant 0 : i32
    %c0_i32_2 = arith.constant 0 : i32
    return %c0_i32, %c0_i32_0, %c0_i32_1 : i32, i32, i32
  }
  func.func @transform_2(%arg0: i32, %arg1: memref<1x2xi32, #tpu.memory_space<smem>>) -> (i32, i32) {
    %c0_i32 = arith.constant 0 : i32
    %c0_i32_0 = arith.constant 0 : i32
    %c0_i32_1 = arith.constant 0 : i32
    return %c0_i32, %c0_i32_0 : i32, i32
  }
  func.func @transform_3(%arg0: i32, %arg1: memref<1x2xi32, #tpu.memory_space<smem>>) -> (i32, i32) {
    %c0_i32 = arith.constant 0 : i32
    %c0_i32_0 = arith.constant 0 : i32
    %c0_i32_1 = arith.constant 0 : i32
    return %c0_i32, %c0_i32_0 : i32, i32
  }
  func.func @transform_4(%arg0: i32, %arg1: memref<1x2xi32, #tpu.memory_space<smem>>) -> (i32, i32) {
    %c0_i32 = arith.constant 0 : i32
    %c0_i32_0 = arith.constant 0 : i32
    %c0_i32_1 = arith.constant 0 : i32
    return %c0_i32, %c0_i32_0 : i32, i32
  }
  func.func @transform_5(%arg0: i32, %arg1: memref<1x2xi32, #tpu.memory_space<smem>>) -> (i32, i32) {
    %c0_i32 = arith.constant 0 : i32
    %c0_i32_0 = arith.constant 0 : i32
    %c0_i32_1 = arith.constant 0 : i32
    return %c0_i32, %c0_i32_0 : i32, i32
  }
  func.func @transform_6(%arg0: i32, %arg1: memref<1x2xi32, #tpu.memory_space<smem>>) -> (i32, i32) {
    %c0_i32 = arith.constant 0 : i32
    %c0_i32_0 = arith.constant 0 : i32
    %c0_i32_1 = arith.constant 0 : i32
    return %c0_i32, %c0_i32_0 : i32, i32
  }
  func.func @transform_7(%arg0: i32, %arg1: memref<1x2xi32, #tpu.memory_space<smem>>) -> (i32, i32) {
    %c0_i32 = arith.constant 0 : i32
    %c0_i32_0 = arith.constant 0 : i32
    %c0_i32_1 = arith.constant 0 : i32
    return %c0_i32, %c0_i32_0 : i32, i32
  }
  func.func @transform_8(%arg0: i32, %arg1: memref<1x2xi32, #tpu.memory_space<smem>>) -> (i32, i32) {
    %c0_i32 = arith.constant 0 : i32
    %c0_i32_0 = arith.constant 0 : i32
    %c0_i32_1 = arith.constant 0 : i32
    return %c0_i32, %c0_i32_0 : i32, i32
  }
  func.func @transform_9(%arg0: i32, %arg1: memref<1x2xi32, #tpu.memory_space<smem>>) -> (i32, i32) {
    %c0_i32 = arith.constant 0 : i32
    %c0_i32_0 = arith.constant 0 : i32
    %c0_i32_1 = arith.constant 0 : i32
    return %c0_i32, %c0_i32_0 : i32, i32
  }
  func.func @transform_10(%arg0: i32, %arg1: memref<1x2xi32, #tpu.memory_space<smem>>) -> (i32, i32) {
    %c0_i32 = arith.constant 0 : i32
    %c0_i32_0 = arith.constant 0 : i32
    %c0_i32_1 = arith.constant 0 : i32
    return %c0_i32, %c0_i32_0 : i32, i32
  }
  func.func @transform_11(%arg0: i32, %arg1: memref<1x2xi32, #tpu.memory_space<smem>>) -> (i32, i32) {
    %c0_i32 = arith.constant 0 : i32
    %c0_i32_0 = arith.constant 0 : i32
    %c0_i32_1 = arith.constant 0 : i32
    return %c0_i32, %c0_i32_0 : i32, i32
  }
  func.func @transform_12(%arg0: i32, %arg1: memref<1x2xi32, #tpu.memory_space<smem>>) -> (i32, i32) {
    %c0_i32 = arith.constant 0 : i32
    %c0_i32_0 = arith.constant 0 : i32
    %c0_i32_1 = arith.constant 0 : i32
    return %c0_i32, %c0_i32_0 : i32, i32
  }
  func.func @transform_13(%arg0: i32, %arg1: memref<1x2xi32, #tpu.memory_space<smem>>) -> (i32, i32) {
    %c0_i32 = arith.constant 0 : i32
    %c0_i32_0 = arith.constant 0 : i32
    %c0_i32_1 = arith.constant 0 : i32
    return %c0_i32, %c0_i32_0 : i32, i32
  }
  func.func @transform_14(%arg0: i32, %arg1: memref<1x2xi32, #tpu.memory_space<smem>>) -> (i32, i32) {
    %c0_i32 = arith.constant 0 : i32
    %c0_i32_0 = arith.constant 0 : i32
    %c0_i32_1 = arith.constant 0 : i32
    return %c0_i32, %c0_i32_0 : i32, i32
  }
  func.func @transform_15(%arg0: i32, %arg1: memref<1x2xi32, #tpu.memory_space<smem>>) -> (i32, i32) {
    %c0_i32 = arith.constant 0 : i32
    %c0_i32_0 = arith.constant 0 : i32
    %c0_i32_1 = arith.constant 0 : i32
    return %c0_i32, %c0_i32_0 : i32, i32
  }
  func.func @transform_16(%arg0: i32, %arg1: memref<1x2xi32, #tpu.memory_space<smem>>) -> (i32, i32) {
    %c0_i32 = arith.constant 0 : i32
    %c0_i32_0 = arith.constant 0 : i32
    %c0_i32_1 = arith.constant 0 : i32
    return %c0_i32, %c0_i32_0 : i32, i32
  }
  func.func @transform_17(%arg0: i32, %arg1: memref<1x2xi32, #tpu.memory_space<smem>>) -> (i32, i32, i32) {
    %c0_i32 = arith.constant 0 : i32
    %c0_i32_0 = arith.constant 0 : i32
    %c0_i32_1 = arith.constant 0 : i32
    return %arg0, %c0_i32, %c0_i32_0 : i32, i32, i32
  }
}

</mosaic_0001>

<llo_original>
// kernel: mul.5
$region0: #{mul.5}
  %s0 = inlined_call_operand.vmem [shape: f32[2,4], index: 0, kind: input, shape index: {}]
  %s1 = inlined_call_operand.vmem [shape: f32[8], index: 1, kind: output, shape index: {}]
  $region1: #{mul.5} parent=0
    #allocation0 [shape = 'u8[4096]{0}', space=vmem, size = 0x1000, scoped, tag = 'scoped mem for output reshape']
    #allocation1 [shape = 'u8[4096]{0}', space=vmem, size = 0x1000, scoped, tag = 'scoped mem for input reshape']
    %s3 = sshll.u32 1, 2
    %s4 = ssub.s32 %s3, 1
    %v5 = vld [vmem:[%s0] sm:%s4]
    %6 = vst [vmem:[#allocation1] sm:%s4] %v5
    %v7 = vld [vmem:[#allocation1] sm:$0x1]
    %vm8 = vcmask 31744
    %9 = vst.msk [vmem:[#allocation0] sm:$0x1] %vm8, %v7
    %s10 = scalar_lea.vmem [#allocation1], 1
    %v11 = vld [vmem:[%s10] sm:$0x1]
    %12 = vrot.lane.b32.xlu0 %v11, 4
    %v13 = vpop.permute.xlu0 %12
    %vm14 = vcmask 64544
    %15 = vst.msk [vmem:[#allocation0] sm:$0x1] %vm14, %v13
    %s17 = sshll.u32 1, 1
    %s18 = ssub.s32 %s17, 1
    %v20 = vld [vmem:[#allocation0] sm:%s18]
    %s21 = sshll.u32 1, 1
    %s22 = ssub.s32 %s21, 1
    %23 = vst [vmem:[%s1] sm:%s22] %v20

// kernel: local_attn_decoder.1
$region0: #{local_attn_decoder.1}
  #allocation0 [shape = 'u32[]', space=smem, size = 0x4, offset = 0x4, fixed_abs, tag = 'smem constant byte address 0x4 - core index']
  #allocation1 [shape = 'u32[144,128]{1,0:T(1,128)}', space=vmem, size = 0x12000, scoped, tag = 'internal scratch']
  #allocation2 [shape = 'f32[2,2,32]{2,1,0:T(2,128)}', space=vmem, size = 0x800, scoped, tag = 'scratch operand']
  #allocation3 [shape = 's32[1]{0}', space=sflag, size = 0x4, scoped, tag = 'scoped memory for local_attn_decoder.1']
  #allocation4 [shape = 'u8[512]{0}', space=smem, size = 0x200, scoped, tag = 'prefetched SMEM operand 0']
  %s0 = inlined_call_operand.vmem [shape: s32[1,2], index: 0, kind: input, shape index: {}]
  %s1 = inlined_call_operand.vmem [shape: f32[2,2,32], index: 1, kind: input, shape index: {}]
  %s2 = inlined_call_operand.vmem [shape: f32[8,8,32], index: 2, kind: input, shape index: {}]
  %s3 = inlined_call_operand.vmem [shape: f32[2,8], index: 3, kind: input, shape index: {}]
  %s4 = inlined_call_operand.vmem [shape: f32[8,2], index: 4, kind: input, shape index: {}]
  %s5 = inlined_call_operand.vmem [shape: f32[64,32], index: 5, kind: input, shape index: {}]
  %s6 = inlined_call_operand.vmem [shape: f32[32,32], index: 6, kind: input, shape index: {}]
  %s7 = inlined_call_operand.vmem [shape: f32[32,128], index: 7, kind: input, shape index: {}]
  %s8 = inlined_call_operand.vmem [shape: f32[32,128], index: 8, kind: input, shape index: {}]
  %s9 = inlined_call_operand.vmem [shape: f32[32,128], index: 9, kind: input, shape index: {}]
  %s10 = inlined_call_operand.vmem [shape: f32[1,128], index: 10, kind: input, shape index: {}]
  %s11 = inlined_call_operand.vmem [shape: f32[32,128], index: 11, kind: input, shape index: {}]
  %s12 = inlined_call_operand.vmem [shape: f32[32,128], index: 12, kind: input, shape index: {}]
  %s13 = inlined_call_operand.vmem [shape: f32[1,128], index: 13, kind: input, shape index: {}]
  %s14 = inlined_call_operand.vmem [shape: f32[32,128], index: 14, kind: input, shape index: {}]
  %s15 = inlined_call_operand.vmem [shape: f32[32,128], index: 15, kind: input, shape index: {}]
  %s16 = inlined_call_operand.vmem [shape: f32[32,128], index: 16, kind: input, shape index: {}]
  %s17 = inlined_call_operand.vmem [shape: f32[1,128], index: 17, kind: input, shape index: {}]
  %s18 = inlined_call_operand.vmem [shape: f32[1,8,128], index: 18, kind: output, shape index: {}]
  %s19 = sld [smem:[#allocation0]]
  $region82: #{local_attn_decoder.1} parent=0
    _
  %s21 = ssub.s32 1, %s19
  %s22 = scalar_select 0, %s21, %s19
  %s23 = sshll.u32 %s0, 4
  %s24 = int_to_ptr.vmem [resolvable:$true] %s23
  %26 = dma.vmem_to_smem %s24, 16, [#allocation4], [#allocation3]
  %27 = dma.done [#allocation3], 16
  %28 = sfence
  // Predicated region
  $region2: #{local_attn_decoder.1} parent=0 // pred_check
    _
  $region3: #{local_attn_decoder.1} parent=0 // pred_check_branch
    %30 = sbr.rel (0) target = $region5
  $region4: #{local_attn_decoder.1} parent=0 // pred_region
    _
  $region5: #{local_attn_decoder.1} parent=0 // pred_fallthru
    _
  // Predicated region
  $region6: #{local_attn_decoder.1} parent=0 // pred_check
    _
  $region7: #{local_attn_decoder.1} parent=0 // pred_check_branch
    %32 = sbr.rel (0) target = $region9
  $region8: #{local_attn_decoder.1} parent=0 // pred_region
    _
  $region9: #{local_attn_decoder.1} parent=0 // pred_fallthru
    _
  // Predicated region
  $region10: #{local_attn_decoder.1} parent=0 // pred_check
    _
  $region11: #{local_attn_decoder.1} parent=0 // pred_check_branch
    %34 = sbr.rel (0) target = $region13
  $region12: #{local_attn_decoder.1} parent=0 // pred_region
    _
  $region13: #{local_attn_decoder.1} parent=0 // pred_fallthru
    _
  // Predicated region
  $region14: #{local_attn_decoder.1} parent=0 // pred_check
    _
  $region15: #{local_attn_decoder.1} parent=0 // pred_check_branch
    %36 = sbr.rel (0) target = $region17
  $region16: #{local_attn_decoder.1} parent=0 // pred_region
    _
  $region17: #{local_attn_decoder.1} parent=0 // pred_fallthru
    _
  // Predicated region
  $region18: #{local_attn_decoder.1} parent=0 // pred_check
    _
  $region19: #{local_attn_decoder.1} parent=0 // pred_check_branch
    %38 = sbr.rel (0) target = $region21
  $region20: #{local_attn_decoder.1} parent=0 // pred_region
    _
  $region21: #{local_attn_decoder.1} parent=0 // pred_fallthru
    _
  // Predicated region
  $region22: #{local_attn_decoder.1} parent=0 // pred_check
    _
  $region23: #{local_attn_decoder.1} parent=0 // pred_check_branch
    %40 = sbr.rel (0) target = $region25
  $region24: #{local_attn_decoder.1} parent=0 // pred_region
    _
  $region25: #{local_attn_decoder.1} parent=0 // pred_fallthru
    _
  // Predicated region
  $region26: #{local_attn_decoder.1} parent=0 // pred_check
    _
  $region27: #{local_attn_decoder.1} parent=0 // pred_check_branch
    %42 = sbr.rel (0) target = $region29
  $region28: #{local_attn_decoder.1} parent=0 // pred_region
    _
  $region29: #{local_attn_decoder.1} parent=0 // pred_fallthru
    _
  // Predicated region
  $region30: #{local_attn_decoder.1} parent=0 // pred_check
    _
  $region31: #{local_attn_decoder.1} parent=0 // pred_check_branch
    %44 = sbr.rel (0) target = $region33
  $region32: #{local_attn_decoder.1} parent=0 // pred_region
    _
  $region33: #{local_attn_decoder.1} parent=0 // pred_fallthru
    _
  // Predicated region
  $region34: #{local_attn_decoder.1} parent=0 // pred_check
    _
  $region35: #{local_attn_decoder.1} parent=0 // pred_check_branch
    %46 = sbr.rel (0) target = $region37
  $region36: #{local_attn_decoder.1} parent=0 // pred_region
    _
  $region37: #{local_attn_decoder.1} parent=0 // pred_fallthru
    _
  // Predicated region
  $region38: #{local_attn_decoder.1} parent=0 // pred_check
    _
  $region39: #{local_attn_decoder.1} parent=0 // pred_check_branch
    %48 = sbr.rel (0) target = $region41
  $region40: #{local_attn_decoder.1} parent=0 // pred_region
    _
  $region41: #{local_attn_decoder.1} parent=0 // pred_fallthru
    _
  // Predicated region
  $region42: #{local_attn_decoder.1} parent=0 // pred_check
    _
  $region43: #{local_attn_decoder.1} parent=0 // pred_check_branch
    %50 = sbr.rel (0) target = $region45
  $region44: #{local_attn_decoder.1} parent=0 // pred_region
    _
  $region45: #{local_attn_decoder.1} parent=0 // pred_fallthru
    _
  // Predicated region
  $region46: #{local_attn_decoder.1} parent=0 // pred_check
    _
  $region47: #{local_attn_decoder.1} parent=0 // pred_check_branch
    %52 = sbr.rel (0) target = $region49
  $region48: #{local_attn_decoder.1} parent=0 // pred_region
    _
  $region49: #{local_attn_decoder.1} parent=0 // pred_fallthru
    _
  // Predicated region
  $region50: #{local_attn_decoder.1} parent=0 // pred_check
    _
  $region51: #{local_attn_decoder.1} parent=0 // pred_check_branch
    %54 = sbr.rel (0) target = $region53
  $region52: #{local_attn_decoder.1} parent=0 // pred_region
    _
  $region53: #{local_attn_decoder.1} parent=0 // pred_fallthru
    _
  // Predicated region
  $region54: #{local_attn_decoder.1} parent=0 // pred_check
    _
  $region55: #{local_attn_decoder.1} parent=0 // pred_check_branch
    %56 = sbr.rel (0) target = $region57
  $region56: #{local_attn_decoder.1} parent=0 // pred_region
    _
  $region57: #{local_attn_decoder.1} parent=0 // pred_fallthru
    _
  // Predicated region
  $region58: #{local_attn_decoder.1} parent=0 // pred_check
    _
  $region59: #{local_attn_decoder.1} parent=0 // pred_check_branch
    %58 = sbr.rel (0) target = $region61
  $region60: #{local_attn_decoder.1} parent=0 // pred_region
    _
  $region61: #{local_attn_decoder.1} parent=0 // pred_fallthru
    _
  // Predicated region
  $region62: #{local_attn_decoder.1} parent=0 // pred_check
    _
  $region63: #{local_attn_decoder.1} parent=0 // pred_check_branch
    %60 = sbr.rel (0) target = $region65
  $region64: #{local_attn_decoder.1} parent=0 // pred_region
    _
  $region65: #{local_attn_decoder.1} parent=0 // pred_fallthru
    _
  // Predicated region
  $region66: #{local_attn_decoder.1} parent=0 // pred_check
    _
  $region67: #{local_attn_decoder.1} parent=0 // pred_check_branch
    %62 = sbr.rel (0) target = $region69
  $region68: #{local_attn_decoder.1} parent=0 // pred_region
    _
  $region69: #{local_attn_decoder.1} parent=0 // pred_fallthru
    _
  %p63 = scmp.eq.s32.totalorder 0, 0
  // Predicated region
  $region70: #{local_attn_decoder.1} parent=0 // pred_check
    %p64 = pneg %p63
  $region71: #{local_attn_decoder.1} parent=0 // pred_check_branch
    %66 = sbr.rel (%p64) target = $region73
  $region72: #{local_attn_decoder.1} parent=0 // pred_region
    %v67 = vld [vmem:[%s1] sm:$0x3]
    %v68 = vld [vmem:[%s1 + $0x2] sm:$0x3]
    %vm69 = vcmask 254976
    %70 = vst.msk [vmem:[#allocation2] sm:$0x3] %vm69, %v67
    %71 = vst.msk [vmem:[#allocation2 + $0x2] sm:$0x3] %vm69, %v68
  $region73: #{local_attn_decoder.1} parent=0 // pred_fallthru
    _
  %v72 = vld [vmem:[#allocation2] sm:$0x3]
  %s73 = scalar_lea.vmem [#allocation2], 2
  %v74 = vld [vmem:[%s73] sm:$0x3]
  %75 = vst [vmem:[%s18] sm:$0xff] 0.0
  %s76 = smul.u32 0, 128
  %s77 = sld [smem:[#allocation4 + %s76]]
  %s78 = scalar_lea.vmem %s5, %s77
  %v79 = vld [vmem:[%s78] sm:$0x1]
  %s80 = sadd.s32 %s76, 1
  %s81 = sld [smem:[#allocation4 + %s80]]
  %s82 = scalar_lea.vmem %s5, %s81
  %v83 = vld [vmem:[%s82] sm:$0x1]
  %v85 = vrot.slane %v83, 7
  %vm87 = vcmask 1040384
  %v88 = vsel %vm87, %v79, %v85
  %v89 = vld [vmem:[%s2] sm:$0xff]
  %v90 = vld [vmem:[%s2 + $0x8] sm:$0xff]
  %v91 = vld [vmem:[%s2 + $0x10] sm:$0xff]
  %v92 = vld [vmem:[%s2 + $0x18] sm:$0xff]
  %v93 = vld [vmem:[%s2 + $0x20] sm:$0xff]
  %v94 = vld [vmem:[%s2 + $0x28] sm:$0xff]
  %v95 = vld [vmem:[%s2 + $0x30] sm:$0xff]
  %v96 = vld [vmem:[%s2 + $0x38] sm:$0xff]
  %v97 = vld [vmem:[%s6] sm:$0xff]
  %v98 = vld [vmem:[%s6 + $0x8] sm:$0xff]
  %v99 = vld [vmem:[%s6 + $0x10] sm:$0xff]
  %v100 = vld [vmem:[%s6 + $0x18] sm:$0xff]
  %vm101 = vcmask 261120
  %v103 = vsel %vm101, %v74, 0
  %105 = vmatprep.subr.mxu0 0.0
  %106 = vmatpush1.msra.mxu0 0.0
  %107 = vmatprep.subr.mxu0 0.0
  %108 = vmatpush1.msra.mxu0 0.0
  %109 = vmatprep.subr.mxu0 0.0
  %110 = vmatpush1.msra.mxu0 0.0
  %111 = vmatprep.subr.mxu0 0.0
  %112 = vmatpush1.msra.mxu0 0.0
  %113 = vmatprep.subr.mxu0 0.0
  %114 = vmatpush1.msra.mxu0 0.0
  %115 = vmatprep.subr.mxu0 0.0
  %116 = vmatpush1.msra.mxu0 0.0
  %117 = vmatprep.subr.mxu0 0.0
  %118 = vmatpush1.msra.mxu0 0.0
  %119 = vmatprep.subr.mxu0 0.0
  %120 = vmatpush1.msra.mxu0 0.0
  %121 = vmatprep.subr.mxu0 0.0
  %122 = vmatpush1.msra.mxu0 0.0
  %123 = vmatprep.subr.mxu0 0.0
  %124 = vmatpush1.msra.mxu0 0.0
  %125 = vmatprep.subr.mxu0 0.0
  %126 = vmatpush1.msra.mxu0 0.0
  %127 = vmatprep.subr.mxu0 0.0
  %128 = vmatpush1.msra.mxu0 0.0
  %129 = vmatprep.subr.mxu0 0.0
  %130 = vmatpush1.msra.mxu0 %v100
  %131 = vmatprep.subr.mxu0 0.0
  %132 = vmatpush1.msra.mxu0 %v99
  %133 = vmatprep.subr.mxu0 0.0
  %134 = vmatpush1.msra.mxu0 %v98
  %135 = vmatprep.subr.mxu0 0.0
  %136 = vmatpush1.msra.mxu0 %v97
  %137 = vmatprep.subr.mxu0 0.0
  %138 = vmatpush2.msra.mxu0 0.0
  %139 = vmatprep.subr.mxu0 0.0
  %140 = vmatpush2.msra.mxu0 0.0
  %141 = vmatprep.subr.mxu0 0.0
  %142 = vmatpush2.msra.mxu0 0.0
  %143 = vmatprep.subr.mxu0 0.0
  %144 = vmatpush2.msra.mxu0 0.0
  %145 = vmatprep.subr.mxu0 0.0
  %146 = vmatpush2.msra.mxu0 0.0
  %147 = vmatprep.subr.mxu0 0.0
  %148 = vmatpush2.msra.mxu0 0.0
  %149 = vmatprep.subr.mxu0 0.0
  %150 = vmatpush2.msra.mxu0 0.0
  %151 = vmatprep.subr.mxu0 0.0
  %152 = vmatpush2.msra.mxu0 0.0
  %153 = vmatprep.subr.mxu0 0.0
  %154 = vmatpush2.msra.mxu0 0.0
  %155 = vmatprep.subr.mxu0 0.0
  %156 = vmatpush2.msra.mxu0 0.0
  %157 = vmatprep.subr.mxu0 0.0
  %158 = vmatpush2.msra.mxu0 0.0
  %159 = vmatprep.subr.mxu0 0.0
  %160 = vmatpush2.msra.mxu0 0.0
  %161 = vmatprep.subr.mxu0 0.0
  %162 = vmatpush2.msra.mxu0 0.0
  %163 = vmatprep.subr.mxu0 0.0
  %164 = vmatpush2.msra.mxu0 0.0
  %165 = vmatprep.subr.mxu0 0.0
  %166 = vmatpush2.msra.mxu0 0.0
  %167 = vmatprep.subr.mxu0 0.0
  %168 = vmatpush2.msra.mxu0 0.0
  %169 = vmatprep.mubr.f32.mxu0 0.0
  %170 = vmatmul.mubr.f32.gmra.mxu0 %v103
  %v171 = vpop.f32.mrf.mxu0
  %v172 = vadd.f32 0.0, %v171
  %v173 = vpop.f32.mrf.mxu0
  %174 = vdwg.mxu0
  %v175 = vld [vmem:[%s4] sm:$0xff]
  %vm176 = vcmask 15360
  %v178 = vsel %vm176, %v175, 0
  %vm180 = vcmask 1041408
  %v182 = vsel %vm180, %v172, 0
  %184 = vmatprep.subr.mxu0 0.0
  %185 = vmatpush1.msra.mxu0 0.0
  %186 = vmatprep.subr.mxu0 0.0
  %187 = vmatpush1.msra.mxu0 0.0
  %188 = vmatprep.subr.mxu0 0.0
  %189 = vmatpush1.msra.mxu0 0.0
  %190 = vmatprep.subr.mxu0 0.0
  %191 = vmatpush1.msra.mxu0 0.0
  %192 = vmatprep.subr.mxu0 0.0
  %193 = vmatpush1.msra.mxu0 0.0
  %194 = vmatprep.subr.mxu0 0.0
  %195 = vmatpush1.msra.mxu0 0.0
  %196 = vmatprep.subr.mxu0 0.0
  %197 = vmatpush1.msra.mxu0 0.0
  %198 = vmatprep.subr.mxu0 0.0
  %199 = vmatpush1.msra.mxu0 0.0
  %200 = vmatprep.subr.mxu0 0.0
  %201 = vmatpush1.msra.mxu0 0.0
  %202 = vmatprep.subr.mxu0 0.0
  %203 = vmatpush1.msra.mxu0 0.0
  %204 = vmatprep.subr.mxu0 0.0
  %205 = vmatpush1.msra.mxu0 0.0
  %206 = vmatprep.subr.mxu0 0.0
  %207 = vmatpush1.msra.mxu0 0.0
  %208 = vmatprep.subr.mxu0 0.0
  %209 = vmatpush1.msra.mxu0 0.0
  %210 = vmatprep.subr.mxu0 0.0
  %211 = vmatpush1.msra.mxu0 0.0
  %212 = vmatprep.subr.mxu0 0.0
  %213 = vmatpush1.msra.mxu0 0.0
  %214 = vmatprep.subr.mxu0 0.0
  %215 = vmatpush1.msra.mxu0 %v182
  %216 = vmatprep.subr.mxu0 0.0
  %217 = vmatpush2.msra.mxu0 0.0
  %218 = vmatprep.subr.mxu0 0.0
  %219 = vmatpush2.msra.mxu0 0.0
  %220 = vmatprep.subr.mxu0 0.0
  %221 = vmatpush2.msra.mxu0 0.0
  %222 = vmatprep.subr.mxu0 0.0
  %223 = vmatpush2.msra.mxu0 0.0
  %224 = vmatprep.subr.mxu0 0.0
  %225 = vmatpush2.msra.mxu0 0.0
  %226 = vmatprep.subr.mxu0 0.0
  %227 = vmatpush2.msra.mxu0 0.0
  %228 = vmatprep.subr.mxu0 0.0
  %229 = vmatpush2.msra.mxu0 0.0
  %230 = vmatprep.subr.mxu0 0.0
  %231 = vmatpush2.msra.mxu0 0.0
  %232 = vmatprep.subr.mxu0 0.0
  %233 = vmatpush2.msra.mxu0 0.0
  %234 = vmatprep.subr.mxu0 0.0
  %235 = vmatpush2.msra.mxu0 0.0
  %236 = vmatprep.subr.mxu0 0.0
  %237 = vmatpush2.msra.mxu0 0.0
  %238 = vmatprep.subr.mxu0 0.0
  %239 = vmatpush2.msra.mxu0 0.0
  %240 = vmatprep.subr.mxu0 0.0
  %241 = vmatpush2.msra.mxu0 0.0
  %242 = vmatprep.subr.mxu0 0.0
  %243 = vmatpush2.msra.mxu0 0.0
  %244 = vmatprep.subr.mxu0 0.0
  %245 = vmatpush2.msra.mxu0 0.0
  %246 = vmatprep.subr.mxu0 0.0
  %247 = vmatpush2.msra.mxu0 0.0
  %248 = vmatprep.mubr.f32.mxu0 0.0
  %249 = vmatmul.mubr.f32.gmra.mxu0 %v178
  %v250 = vpop.f32.mrf.mxu0
  %v251 = vadd.f32 0.0, %v250
  %v252 = vpop.f32.mrf.mxu0
  %253 = vdwg.mxu0
  %v255 = vcombine.high %v251, %v251
  %v257 = vunpack.c.l.s4 1966171168
  %v258 = vunpack.c.0.s8 %v257
  %v259 = vlaneseq
  %v260 = vshrl.u32 %v259, 7
  %v261 = vsub.s32 %v258, %v260
  %v262 = vrot.slane %v251, %v261
  %v264 = vunpack.c.l.s4 1966171168
  %v265 = vunpack.c.0.s8 %v264
  %v266 = vlaneseq
  %v267 = vshrl.u32 %v266, 7
  %v268 = vsub.s32 %v265, %v267
  %v269 = vrot.slane %v255, %v268
  %v270 = vcombine.high %v262, %v262
  %v271 = vcombine.high %v269, %v269
  %v273 = vunpack.c.l.s4 1966171168
  %v274 = vunpack.c.0.s8 %v273
  %v275 = vlaneseq
  %v276 = vshrl.u32 %v275, 7
  %v277 = vsub.s32 %v274, %v276
  %v278 = vrot.slane %v262, %v277
  %v280 = vunpack.c.l.s4 1966171168
  %v281 = vunpack.c.0.s8 %v280
  %v282 = vlaneseq
  %v283 = vshrl.u32 %v282, 7
  %v284 = vsub.s32 %v281, %v283
  %v285 = vrot.slane %v269, %v284
  %v287 = vunpack.c.l.s4 1966171168
  %v288 = vunpack.c.0.s8 %v287
  %v289 = vlaneseq
  %v290 = vshrl.u32 %v289, 7
  %v291 = vsub.s32 %v288, %v290
  %v292 = vrot.slane %v270, %v291
  %v294 = vunpack.c.l.s4 1966171168
  %v295 = vunpack.c.0.s8 %v294
  %v296 = vlaneseq
  %v297 = vshrl.u32 %v296, 7
  %v298 = vsub.s32 %v295, %v297
  %v299 = vrot.slane %v271, %v298
  %v300 = vcombine.high %v278, %v278
  %v301 = vcombine.high %v285, %v285
  %v302 = vcombine.high %v292, %v292
  %v303 = vcombine.high %v299, %v299
  %v304 = vlaneseq
  %v305 = vshrl.u32 %v304, 7
  %v306 = vsub.s32 0, %v305
  %v307 = vrot.slane %v278, %v306
  %v308 = vlaneseq
  %v309 = vshrl.u32 %v308, 7
  %v310 = vsub.s32 0, %v309
  %v311 = vrot.slane %v292, %v310
  %v312 = vlaneseq
  %v313 = vshrl.u32 %v312, 7
  %v314 = vsub.s32 0, %v313
  %v315 = vrot.slane %v300, %v314
  %v316 = vlaneseq
  %v317 = vshrl.u32 %v316, 7
  %v318 = vsub.s32 0, %v317
  %v319 = vrot.slane %v302, %v318
  %v320 = vlaneseq
  %v321 = vshrl.u32 %v320, 7
  %v322 = vsub.s32 0, %v321
  %v323 = vrot.slane %v285, %v322
  %v324 = vlaneseq
  %v325 = vshrl.u32 %v324, 7
  %v326 = vsub.s32 0, %v325
  %v327 = vrot.slane %v299, %v326
  %v328 = vlaneseq
  %v329 = vshrl.u32 %v328, 7
  %v330 = vsub.s32 0, %v329
  %v331 = vrot.slane %v301, %v330
  %v332 = vlaneseq
  %v333 = vshrl.u32 %v332, 7
  %v334 = vsub.s32 0, %v333
  %v335 = vrot.slane %v303, %v334
  %v344 = vmul.f32 %v307, %v89
  %v345 = vmul.f32 %v311, %v90
  %v346 = vmul.f32 %v315, %v91
  %v347 = vmul.f32 %v319, %v92
  %v348 = vmul.f32 %v323, %v93
  %v349 = vmul.f32 %v327, %v94
  %v350 = vmul.f32 %v331, %v95
  %v351 = vmul.f32 %v335, %v96
  %v352 = vsel %vm101, %v344, 0.0
  %353 = vadd.xlane.f32.xlu0 %v352
  %v354 = vpop.xlane.xlu0 %353
  %v355 = vsel %vm101, %v345, 0.0
  %356 = vadd.xlane.f32.xlu0 %v355
  %v357 = vpop.xlane.xlu0 %356
  %v358 = vsel %vm101, %v346, 0.0
  %359 = vadd.xlane.f32.xlu0 %v358
  %v360 = vpop.xlane.xlu0 %359
  %v361 = vsel %vm101, %v347, 0.0
  %362 = vadd.xlane.f32.xlu0 %v361
  %v363 = vpop.xlane.xlu0 %362
  %v364 = vsel %vm101, %v348, 0.0
  %365 = vadd.xlane.f32.xlu0 %v364
  %v366 = vpop.xlane.xlu0 %365
  %v367 = vsel %vm101, %v349, 0.0
  %368 = vadd.xlane.f32.xlu0 %v367
  %v369 = vpop.xlane.xlu0 %368
  %v370 = vsel %vm101, %v350, 0.0
  %371 = vadd.xlane.f32.xlu0 %v370
  %v372 = vpop.xlane.xlu0 %371
  %v373 = vsel %vm101, %v351, 0.0
  %374 = vadd.xlane.f32.xlu0 %v373
  %v375 = vpop.xlane.xlu0 %374
  %v384 = vlaneseq
  %v385 = vand.u32 %v384, 127
  %v386 = vlaneseq
  %v387 = vshrl.u32 %v386, 7
  %v388 = vsub.s32 %v385, %v387
  %v389 = vrot.slane %v354, %v388
  %v390 = vlaneseq
  %v391 = vshrl.u32 %v390, 7
  %v392 = vsub.s32 %v385, %v391
  %v393 = vrot.slane %v357, %v392
  %v394 = vlaneseq
  %v395 = vshrl.u32 %v394, 7
  %v396 = vsub.s32 %v385, %v395
  %v397 = vrot.slane %v360, %v396
  %v398 = vlaneseq
  %v399 = vshrl.u32 %v398, 7
  %v400 = vsub.s32 %v385, %v399
  %v401 = vrot.slane %v363, %v400
  %v402 = vlaneseq
  %v403 = vshrl.u32 %v402, 7
  %v404 = vsub.s32 %v385, %v403
  %v405 = vrot.slane %v366, %v404
  %v406 = vlaneseq
  %v407 = vshrl.u32 %v406, 7
  %v408 = vsub.s32 %v385, %v407
  %v409 = vrot.slane %v369, %v408
  %v410 = vlaneseq
  %v411 = vshrl.u32 %v410, 7
  %v412 = vsub.s32 %v385, %v411
  %v413 = vrot.slane %v372, %v412
  %v414 = vlaneseq
  %v415 = vshrl.u32 %v414, 7
  %v416 = vsub.s32 %v385, %v415
  %v417 = vrot.slane %v375, %v416
  %vm418 = vcmask 1041409
  %v419 = vsel %vm418, %v393, %v389
  %vm420 = vcmask 1042434
  %v421 = vsel %vm420, %v397, %v419
  %vm422 = vcmask 1043459
  %v423 = vsel %vm422, %v401, %v421
  %vm424 = vcmask 1044484
  %v425 = vsel %vm424, %v405, %v423
  %vm426 = vcmask 1045509
  %v427 = vsel %vm426, %v409, %v425
  %vm428 = vcmask 1046534
  %v429 = vsel %vm428, %v413, %v427
  %vm430 = vcmask 1047559
  %v431 = vsel %vm430, %v417, %v429
  %vm433 = vcmask 64512
  %v434 = vsel %vm433, %v431, -inf
  %435 = vmax.xlane.f32.xlu0 %v434
  %v436 = vpop.xlane.xlu0 %435
  %v438 = vlaneseq
  %v439 = vshrl.u32 %v438, 7
  %v440 = vsub.s32 0, %v439
  %v441 = vrot.slane %v436, %v440
  %v442 = vlaneseq
  %v443 = vshrl.u32 %v442, 7
  %v444 = vsub.s32 1, %v443
  %v445 = vrot.slane %v436, %v444
  %v446 = vlaneseq
  %v447 = vshrl.u32 %v446, 7
  %v448 = vsub.s32 2, %v447
  %v449 = vrot.slane %v436, %v448
  %v450 = vlaneseq
  %v451 = vshrl.u32 %v450, 7
  %v452 = vsub.s32 3, %v451
  %v453 = vrot.slane %v436, %v452
  %v454 = vlaneseq
  %v455 = vshrl.u32 %v454, 7
  %v456 = vsub.s32 4, %v455
  %v457 = vrot.slane %v436, %v456
  %v458 = vlaneseq
  %v459 = vshrl.u32 %v458, 7
  %v460 = vsub.s32 5, %v459
  %v461 = vrot.slane %v436, %v460
  %v462 = vlaneseq
  %v463 = vshrl.u32 %v462, 7
  %v464 = vsub.s32 6, %v463
  %v465 = vrot.slane %v436, %v464
  %v466 = vlaneseq
  %v467 = vshrl.u32 %v466, 7
  %v468 = vsub.s32 7, %v467
  %v469 = vrot.slane %v436, %v468
  %v478 = vsub.f32 %v354, %v441
  %v479 = vsub.f32 %v357, %v445
  %v480 = vsub.f32 %v360, %v449
  %v481 = vsub.f32 %v363, %v453
  %v482 = vsub.f32 %v366, %v457
  %v483 = vsub.f32 %v369, %v461
  %v484 = vsub.f32 %v372, %v465
  %v485 = vsub.f32 %v375, %v469
  %v486 = vmul.f32 %v478, 1.442695
  %v487 = vpow.pop %v486
  %v488 = vmul.f32 %v479, 1.442695
  %v489 = vpow.pop %v488
  %v490 = vmul.f32 %v480, 1.442695
  %v491 = vpow.pop %v490
  %v492 = vmul.f32 %v481, 1.442695
  %v493 = vpow.pop %v492
  %v494 = vmul.f32 %v482, 1.442695
  %v495 = vpow.pop %v494
  %v496 = vmul.f32 %v483, 1.442695
  %v497 = vpow.pop %v496
  %v498 = vmul.f32 %v484, 1.442695
  %v499 = vpow.pop %v498
  %v500 = vmul.f32 %v485, 1.442695
  %v501 = vpow.pop %v500
  %510 = vset.pattern.permute.xlu0 0
  %511 = vperm.xlu0 %510, %v487
  %v512 = vpop.permute.xlu0 %511
  %513 = vset.pattern.permute.xlu0 0
  %514 = vperm.xlu0 %513, %v489
  %v515 = vpop.permute.xlu0 %514
  %516 = vset.pattern.permute.xlu0 0
  %517 = vperm.xlu0 %516, %v491
  %v518 = vpop.permute.xlu0 %517
  %519 = vset.pattern.permute.xlu0 0
  %520 = vperm.xlu0 %519, %v493
  %v521 = vpop.permute.xlu0 %520
  %522 = vset.pattern.permute.xlu0 0
  %523 = vperm.xlu0 %522, %v495
  %v524 = vpop.permute.xlu0 %523
  %525 = vset.pattern.permute.xlu0 0
  %526 = vperm.xlu0 %525, %v497
  %v527 = vpop.permute.xlu0 %526
  %528 = vset.pattern.permute.xlu0 0
  %529 = vperm.xlu0 %528, %v499
  %v530 = vpop.permute.xlu0 %529
  %531 = vset.pattern.permute.xlu0 0
  %532 = vperm.xlu0 %531, %v501
  %v533 = vpop.permute.xlu0 %532
  %v534 = vlaneseq
  %v535 = vshrl.u32 %v534, 7
  %v536 = vsub.s32 %v385, %v535
  %v537 = vrot.slane %v512, %v536
  %v538 = vlaneseq
  %v539 = vshrl.u32 %v538, 7
  %v540 = vsub.s32 %v385, %v539
  %v541 = vrot.slane %v515, %v540
  %v542 = vlaneseq
  %v543 = vshrl.u32 %v542, 7
  %v544 = vsub.s32 %v385, %v543
  %v545 = vrot.slane %v518, %v544
  %v546 = vlaneseq
  %v547 = vshrl.u32 %v546, 7
  %v548 = vsub.s32 %v385, %v547
  %v549 = vrot.slane %v521, %v548
  %v550 = vlaneseq
  %v551 = vshrl.u32 %v550, 7
  %v552 = vsub.s32 %v385, %v551
  %v553 = vrot.slane %v524, %v552
  %v554 = vlaneseq
  %v555 = vshrl.u32 %v554, 7
  %v556 = vsub.s32 %v385, %v555
  %v557 = vrot.slane %v527, %v556
  %v558 = vlaneseq
  %v559 = vshrl.u32 %v558, 7
  %v560 = vsub.s32 %v385, %v559
  %v561 = vrot.slane %v530, %v560
  %v562 = vlaneseq
  %v563 = vshrl.u32 %v562, 7
  %v564 = vsub.s32 %v385, %v563
  %v565 = vrot.slane %v533, %v564
  %v566 = vsel %vm418, %v541, %v537
  %v567 = vsel %vm420, %v545, %v566
  %v568 = vsel %vm422, %v549, %v567
  %v569 = vsel %vm424, %v553, %v568
  %v570 = vsel %vm426, %v557, %v569
  %v571 = vsel %vm428, %v561, %v570
  %v572 = vsel %vm430, %v565, %v571
  %v574 = vsel %vm433, %v572, 0.0
  %575 = vadd.xlane.f32.xlu0 %v574
  %v576 = vpop.xlane.xlu0 %575
  %v578 = vlaneseq
  %v579 = vshrl.u32 %v578, 7
  %v580 = vsub.s32 0, %v579
  %v581 = vrot.slane %v576, %v580
  %v582 = vlaneseq
  %v583 = vshrl.u32 %v582, 7
  %v584 = vsub.s32 1, %v583
  %v585 = vrot.slane %v576, %v584
  %v586 = vlaneseq
  %v587 = vshrl.u32 %v586, 7
  %v588 = vsub.s32 2, %v587
  %v589 = vrot.slane %v576, %v588
  %v590 = vlaneseq
  %v591 = vshrl.u32 %v590, 7
  %v592 = vsub.s32 3, %v591
  %v593 = vrot.slane %v576, %v592
  %v594 = vlaneseq
  %v595 = vshrl.u32 %v594, 7
  %v596 = vsub.s32 4, %v595
  %v597 = vrot.slane %v576, %v596
  %v598 = vlaneseq
  %v599 = vshrl.u32 %v598, 7
  %v600 = vsub.s32 5, %v599
  %v601 = vrot.slane %v576, %v600
  %v602 = vlaneseq
  %v603 = vshrl.u32 %v602, 7
  %v604 = vsub.s32 6, %v603
  %v605 = vrot.slane %v576, %v604
  %v606 = vlaneseq
  %v607 = vshrl.u32 %v606, 7
  %v608 = vsub.s32 7, %v607
  %v609 = vrot.slane %v576, %v608
  %v618 = vrcp.pop %v581
  %v619 = vmul.f32 %v487, %v618
  %v620 = vrcp.pop %v585
  %v621 = vmul.f32 %v489, %v620
  %v622 = vrcp.pop %v589
  %v623 = vmul.f32 %v491, %v622
  %v624 = vrcp.pop %v593
  %v625 = vmul.f32 %v493, %v624
  %v626 = vrcp.pop %v597
  %v627 = vmul.f32 %v495, %v626
  %v628 = vrcp.pop %v601
  %v629 = vmul.f32 %v497, %v628
  %v630 = vrcp.pop %v605
  %v631 = vmul.f32 %v499, %v630
  %v632 = vrcp.pop %v609
  %v633 = vmul.f32 %v501, %v632
  %642 = vset.pattern.permute.xlu0 0
  %643 = vperm.xlu0 %642, %v619
  %v644 = vpop.permute.xlu0 %643
  %645 = vset.pattern.permute.xlu0 0
  %646 = vperm.xlu0 %645, %v621
  %v647 = vpop.permute.xlu0 %646
  %648 = vset.pattern.permute.xlu0 0
  %649 = vperm.xlu0 %648, %v623
  %v650 = vpop.permute.xlu0 %649
  %651 = vset.pattern.permute.xlu0 0
  %652 = vperm.xlu0 %651, %v625
  %v653 = vpop.permute.xlu0 %652
  %654 = vset.pattern.permute.xlu0 0
  %655 = vperm.xlu0 %654, %v627
  %v656 = vpop.permute.xlu0 %655
  %657 = vset.pattern.permute.xlu0 0
  %658 = vperm.xlu0 %657, %v629
  %v659 = vpop.permute.xlu0 %658
  %660 = vset.pattern.permute.xlu0 0
  %661 = vperm.xlu0 %660, %v631
  %v662 = vpop.permute.xlu0 %661
  %663 = vset.pattern.permute.xlu0 0
  %664 = vperm.xlu0 %663, %v633
  %v665 = vpop.permute.xlu0 %664
  %v666 = vadd.s32 %v385, 4294967200
  %v667 = vlaneseq
  %v668 = vshrl.u32 %v667, 7
  %v669 = vsub.s32 %v666, %v668
  %v670 = vrot.slane %v644, %v669
  %v671 = vlaneseq
  %v672 = vshrl.u32 %v671, 7
  %v673 = vsub.s32 %v666, %v672
  %v674 = vrot.slane %v647, %v673
  %v675 = vlaneseq
  %v676 = vshrl.u32 %v675, 7
  %v677 = vsub.s32 %v666, %v676
  %v678 = vrot.slane %v650, %v677
  %v679 = vlaneseq
  %v680 = vshrl.u32 %v679, 7
  %v681 = vsub.s32 %v666, %v680
  %v682 = vrot.slane %v653, %v681
  %v683 = vlaneseq
  %v684 = vshrl.u32 %v683, 7
  %v685 = vsub.s32 %v666, %v684
  %v686 = vrot.slane %v656, %v685
  %v687 = vlaneseq
  %v688 = vshrl.u32 %v687, 7
  %v689 = vsub.s32 %v666, %v688
  %v690 = vrot.slane %v659, %v689
  %v691 = vlaneseq
  %v692 = vshrl.u32 %v691, 7
  %v693 = vsub.s32 %v666, %v692
  %v694 = vrot.slane %v662, %v693
  %v695 = vlaneseq
  %v696 = vshrl.u32 %v695, 7
  %v697 = vsub.s32 %v666, %v696
  %v698 = vrot.slane %v665, %v697
  %v699 = vsel %vm418, %v674, %v670
  %v700 = vsel %vm420, %v678, %v699
  %v701 = vsel %vm422, %v682, %v700
  %v702 = vsel %vm424, %v686, %v701
  %v703 = vsel %vm426, %v690, %v702
  %v704 = vsel %vm428, %v694, %v703
  %v705 = vsel %vm430, %v698, %v704
  %vm707 = vcmask 851712
  %708 = vst.msk [vmem:[%s18] sm:$0xff] %vm707, %v705
  %v717 = vmul.f32 %v644, %v89
  %v718 = vmul.f32 %v647, %v90
  %v719 = vmul.f32 %v650, %v91
  %v720 = vmul.f32 %v653, %v92
  %v721 = vmul.f32 %v656, %v93
  %v722 = vmul.f32 %v659, %v94
  %v723 = vmul.f32 %v662, %v95
  %v724 = vmul.f32 %v665, %v96
  %v725 = vsel %vm101, %v717, 0.0
  %v726 = vrot.slane %v725, 4
  %v727 = vadd.f32 %v725, %v726
  %v728 = vrot.slane %v727, 2
  %v729 = vadd.f32 %v727, %v728
  %v730 = vrot.slane %v729, 1
  %v731 = vadd.f32 %v729, %v730
  %v732 = vsel %vm101, %v718, 0.0
  %v733 = vrot.slane %v732, 4
  %v734 = vadd.f32 %v732, %v733
  %v735 = vrot.slane %v734, 2
  %v736 = vadd.f32 %v734, %v735
  %v737 = vrot.slane %v736, 1
  %v738 = vadd.f32 %v736, %v737
  %v739 = vsel %vm101, %v719, 0.0
  %v740 = vrot.slane %v739, 4
  %v741 = vadd.f32 %v739, %v740
  %v742 = vrot.slane %v741, 2
  %v743 = vadd.f32 %v741, %v742
  %v744 = vrot.slane %v743, 1
  %v745 = vadd.f32 %v743, %v744
  %v746 = vsel %vm101, %v720, 0.0
  %v747 = vrot.slane %v746, 4
  %v748 = vadd.f32 %v746, %v747
  %v749 = vrot.slane %v748, 2
  %v750 = vadd.f32 %v748, %v749
  %v751 = vrot.slane %v750, 1
  %v752 = vadd.f32 %v750, %v751
  %v753 = vsel %vm101, %v721, 0.0
  %v754 = vrot.slane %v753, 4
  %v755 = vadd.f32 %v753, %v754
  %v756 = vrot.slane %v755, 2
  %v757 = vadd.f32 %v755, %v756
  %v758 = vrot.slane %v757, 1
  %v759 = vadd.f32 %v757, %v758
  %v760 = vsel %vm101, %v722, 0.0
  %v761 = vrot.slane %v760, 4
  %v762 = vadd.f32 %v760, %v761
  %v763 = vrot.slane %v762, 2
  %v764 = vadd.f32 %v762, %v763
  %v765 = vrot.slane %v764, 1
  %v766 = vadd.f32 %v764, %v765
  %v767 = vsel %vm101, %v723, 0.0
  %v768 = vrot.slane %v767, 4
  %v769 = vadd.f32 %v767, %v768
  %v770 = vrot.slane %v769, 2
  %v771 = vadd.f32 %v769, %v770
  %v772 = vrot.slane %v771, 1
  %v773 = vadd.f32 %v771, %v772
  %v774 = vsel %vm101, %v724, 0.0
  %v775 = vrot.slane %v774, 4
  %v776 = vadd.f32 %v774, %v775
  %v777 = vrot.slane %v776, 2
  %v778 = vadd.f32 %v776, %v777
  %v779 = vrot.slane %v778, 1
  %v780 = vadd.f32 %v778, %v779
  %v781 = vld [vmem:[%s3] sm:$0x3]
  %v790 = vsel %vm418, %v738, %v731
  %v791 = vsel %vm420, %v745, %v790
  %v792 = vsel %vm422, %v752, %v791
  %v793 = vsel %vm424, %v759, %v792
  %v794 = vsel %vm426, %v766, %v793
  %v795 = vsel %vm428, %v773, %v794
  %v796 = vsel %vm430, %v780, %v795
  %v799 = vsel %vm433, %v781, 0
  %801 = vmatprep.subr.mxu0 0.0
  %802 = vmatpush1.msra.mxu0 0.0
  %803 = vmatprep.subr.mxu0 0.0
  %804 = vmatpush1.msra.mxu0 0.0
  %805 = vmatprep.subr.mxu0 0.0
  %806 = vmatpush1.msra.mxu0 0.0
  %807 = vmatprep.subr.mxu0 0.0
  %808 = vmatpush1.msra.mxu0 0.0
  %809 = vmatprep.subr.mxu0 0.0
  %810 = vmatpush1.msra.mxu0 0.0
  %811 = vmatprep.subr.mxu0 0.0
  %812 = vmatpush1.msra.mxu0 0.0
  %813 = vmatprep.subr.mxu0 0.0
  %814 = vmatpush1.msra.mxu0 0.0
  %815 = vmatprep.subr.mxu0 0.0
  %816 = vmatpush1.msra.mxu0 0.0
  %817 = vmatprep.subr.mxu0 0.0
  %818 = vmatpush1.msra.mxu0 0.0
  %819 = vmatprep.subr.mxu0 0.0
  %820 = vmatpush1.msra.mxu0 0.0
  %821 = vmatprep.subr.mxu0 0.0
  %822 = vmatpush1.msra.mxu0 0.0
  %823 = vmatprep.subr.mxu0 0.0
  %824 = vmatpush1.msra.mxu0 0.0
  %825 = vmatprep.subr.mxu0 0.0
  %826 = vmatpush1.msra.mxu0 0.0
  %827 = vmatprep.subr.mxu0 0.0
  %828 = vmatpush1.msra.mxu0 0.0
  %829 = vmatprep.subr.mxu0 0.0
  %830 = vmatpush1.msra.mxu0 0.0
  %831 = vmatprep.subr.mxu0 0.0
  %832 = vmatpush1.msra.mxu0 %v796
  %833 = vmatprep.subr.mxu0 0.0
  %834 = vmatpush2.msra.mxu0 0.0
  %835 = vmatprep.subr.mxu0 0.0
  %836 = vmatpush2.msra.mxu0 0.0
  %837 = vmatprep.subr.mxu0 0.0
  %838 = vmatpush2.msra.mxu0 0.0
  %839 = vmatprep.subr.mxu0 0.0
  %840 = vmatpush2.msra.mxu0 0.0
  %841 = vmatprep.subr.mxu0 0.0
  %842 = vmatpush2.msra.mxu0 0.0
  %843 = vmatprep.subr.mxu0 0.0
  %844 = vmatpush2.msra.mxu0 0.0
  %845 = vmatprep.subr.mxu0 0.0
  %846 = vmatpush2.msra.mxu0 0.0
  %847 = vmatprep.subr.mxu0 0.0
  %848 = vmatpush2.msra.mxu0 0.0
  %849 = vmatprep.subr.mxu0 0.0
  %850 = vmatpush2.msra.mxu0 0.0
  %851 = vmatprep.subr.mxu0 0.0
  %852 = vmatpush2.msra.mxu0 0.0
  %853 = vmatprep.subr.mxu0 0.0
  %854 = vmatpush2.msra.mxu0 0.0
  %855 = vmatprep.subr.mxu0 0.0
  %856 = vmatpush2.msra.mxu0 0.0
  %857 = vmatprep.subr.mxu0 0.0
  %858 = vmatpush2.msra.mxu0 0.0
  %859 = vmatprep.subr.mxu0 0.0
  %860 = vmatpush2.msra.mxu0 0.0
  %861 = vmatprep.subr.mxu0 0.0
  %862 = vmatpush2.msra.mxu0 0.0
  %863 = vmatprep.subr.mxu0 0.0
  %864 = vmatpush2.msra.mxu0 0.0
  %865 = vmatprep.mubr.f32.mxu0 0.0
  %866 = vmatmul.mubr.f32.gmra.mxu0 %v799
  %v867 = vpop.f32.mrf.mxu0
  %v868 = vadd.f32 0.0, %v867
  %v869 = vpop.f32.mrf.mxu0
  %870 = vdwg.mxu0
  %vm871 = vcmask 254976
  %872 = vst.msk [vmem:[%s18 + $0x6] sm:$0x3] %vm871, %v868
  %v873 = vld [vmem:[%s7] sm:$0xff]
  %v874 = vld [vmem:[%s7 + $0x8] sm:$0xff]
  %v875 = vld [vmem:[%s7 + $0x10] sm:$0xff]
  %v876 = vld [vmem:[%s7 + $0x18] sm:$0xff]
  %v877 = vld [vmem:[%s8] sm:$0xff]
  %v878 = vld [vmem:[%s8 + $0x8] sm:$0xff]
  %v879 = vld [vmem:[%s8 + $0x10] sm:$0xff]
  %v880 = vld [vmem:[%s8 + $0x18] sm:$0xff]
  %v882 = vsel %vm101, %v868, 0
  %884 = vmatprep.subr.mxu0 0.0
  %885 = vmatpush1.msra.mxu0 0.0
  %886 = vmatprep.subr.mxu0 0.0
  %887 = vmatpush1.msra.mxu0 0.0
  %888 = vmatprep.subr.mxu0 0.0
  %889 = vmatpush1.msra.mxu0 0.0
  %890 = vmatprep.subr.mxu0 0.0
  %891 = vmatpush1.msra.mxu0 0.0
  %892 = vmatprep.subr.mxu0 0.0
  %893 = vmatpush1.msra.mxu0 0.0
  %894 = vmatprep.subr.mxu0 0.0
  %895 = vmatpush1.msra.mxu0 0.0
  %896 = vmatprep.subr.mxu0 0.0
  %897 = vmatpush1.msra.mxu0 0.0
  %898 = vmatprep.subr.mxu0 0.0
  %899 = vmatpush1.msra.mxu0 0.0
  %900 = vmatprep.subr.mxu0 0.0
  %901 = vmatpush1.msra.mxu0 0.0
  %902 = vmatprep.subr.mxu0 0.0
  %903 = vmatpush1.msra.mxu0 0.0
  %904 = vmatprep.subr.mxu0 0.0
  %905 = vmatpush1.msra.mxu0 0.0
  %906 = vmatprep.subr.mxu0 0.0
  %907 = vmatpush1.msra.mxu0 0.0
  %908 = vmatprep.subr.mxu0 0.0
  %909 = vmatpush1.msra.mxu0 %v880
  %910 = vmatprep.subr.mxu0 0.0
  %911 = vmatpush1.msra.mxu0 %v879
  %912 = vmatprep.subr.mxu0 0.0
  %913 = vmatpush1.msra.mxu0 %v878
  %914 = vmatprep.subr.mxu0 0.0
  %915 = vmatpush1.msra.mxu0 %v877
  %916 = vmatprep.subr.mxu0 0.0
  %917 = vmatpush2.msra.mxu0 0.0
  %918 = vmatprep.subr.mxu0 0.0
  %919 = vmatpush2.msra.mxu0 0.0
  %920 = vmatprep.subr.mxu0 0.0
  %921 = vmatpush2.msra.mxu0 0.0
  %922 = vmatprep.subr.mxu0 0.0
  %923 = vmatpush2.msra.mxu0 0.0
  %924 = vmatprep.subr.mxu0 0.0
  %925 = vmatpush2.msra.mxu0 0.0
  %926 = vmatprep.subr.mxu0 0.0
  %927 = vmatpush2.msra.mxu0 0.0
  %928 = vmatprep.subr.mxu0 0.0
  %929 = vmatpush2.msra.mxu0 0.0
  %930 = vmatprep.subr.mxu0 0.0
  %931 = vmatpush2.msra.mxu0 0.0
  %932 = vmatprep.subr.mxu0 0.0
  %933 = vmatpush2.msra.mxu0 0.0
  %934 = vmatprep.subr.mxu0 0.0
  %935 = vmatpush2.msra.mxu0 0.0
  %936 = vmatprep.subr.mxu0 0.0
  %937 = vmatpush2.msra.mxu0 0.0
  %938 = vmatprep.subr.mxu0 0.0
  %939 = vmatpush2.msra.mxu0 0.0
  %940 = vmatprep.subr.mxu0 0.0
  %941 = vmatpush2.msra.mxu0 0.0
  %942 = vmatprep.subr.mxu0 0.0
  %943 = vmatpush2.msra.mxu0 0.0
  %944 = vmatprep.subr.mxu0 0.0
  %945 = vmatpush2.msra.mxu0 0.0
  %946 = vmatprep.subr.mxu0 0.0
  %947 = vmatpush2.msra.mxu0 0.0
  %948 = vmatprep.mubr.f32.mxu0 0.0
  %949 = vmatmul.mubr.f32.gmra.mxu0 %v882
  %v950 = vpop.f32.mrf.mxu0
  %v951 = vadd.f32 0.0, %v950
  %v952 = vpop.f32.mrf.mxu0
  %953 = vdwg.mxu0
  %v955 = vsel %vm101, %v88, 0
  %957 = vmatprep.subr.mxu0 0.0
  %958 = vmatpush1.msra.mxu0 0.0
  %959 = vmatprep.subr.mxu0 0.0
  %960 = vmatpush1.msra.mxu0 0.0
  %961 = vmatprep.subr.mxu0 0.0
  %962 = vmatpush1.msra.mxu0 0.0
  %963 = vmatprep.subr.mxu0 0.0
  %964 = vmatpush1.msra.mxu0 0.0
  %965 = vmatprep.subr.mxu0 0.0
  %966 = vmatpush1.msra.mxu0 0.0
  %967 = vmatprep.subr.mxu0 0.0
  %968 = vmatpush1.msra.mxu0 0.0
  %969 = vmatprep.subr.mxu0 0.0
  %970 = vmatpush1.msra.mxu0 0.0
  %971 = vmatprep.subr.mxu0 0.0
  %972 = vmatpush1.msra.mxu0 0.0
  %973 = vmatprep.subr.mxu0 0.0
  %974 = vmatpush1.msra.mxu0 0.0
  %975 = vmatprep.subr.mxu0 0.0
  %976 = vmatpush1.msra.mxu0 0.0
  %977 = vmatprep.subr.mxu0 0.0
  %978 = vmatpush1.msra.mxu0 0.0
  %979 = vmatprep.subr.mxu0 0.0
  %980 = vmatpush1.msra.mxu0 0.0
  %981 = vmatprep.subr.mxu0 0.0
  %982 = vmatpush1.msra.mxu0 %v876
  %983 = vmatprep.subr.mxu0 0.0
  %984 = vmatpush1.msra.mxu0 %v875
  %985 = vmatprep.subr.mxu0 0.0
  %986 = vmatpush1.msra.mxu0 %v874
  %987 = vmatprep.subr.mxu0 0.0
  %988 = vmatpush1.msra.mxu0 %v873
  %989 = vmatprep.subr.mxu0 0.0
  %990 = vmatpush2.msra.mxu0 0.0
  %991 = vmatprep.subr.mxu0 0.0
  %992 = vmatpush2.msra.mxu0 0.0
  %993 = vmatprep.subr.mxu0 0.0
  %994 = vmatpush2.msra.mxu0 0.0
  %995 = vmatprep.subr.mxu0 0.0
  %996 = vmatpush2.msra.mxu0 0.0
  %997 = vmatprep.subr.mxu0 0.0
  %998 = vmatpush2.msra.mxu0 0.0
  %999 = vmatprep.subr.mxu0 0.0
  %1000 = vmatpush2.msra.mxu0 0.0
  %1001 = vmatprep.subr.mxu0 0.0
  %1002 = vmatpush2.msra.mxu0 0.0
  %1003 = vmatprep.subr.mxu0 0.0
  %1004 = vmatpush2.msra.mxu0 0.0
  %1005 = vmatprep.subr.mxu0 0.0
  %1006 = vmatpush2.msra.mxu0 0.0
  %1007 = vmatprep.subr.mxu0 0.0
  %1008 = vmatpush2.msra.mxu0 0.0
  %1009 = vmatprep.subr.mxu0 0.0
  %1010 = vmatpush2.msra.mxu0 0.0
  %1011 = vmatprep.subr.mxu0 0.0
  %1012 = vmatpush2.msra.mxu0 0.0
  %1013 = vmatprep.subr.mxu0 0.0
  %1014 = vmatpush2.msra.mxu0 0.0
  %1015 = vmatprep.subr.mxu0 0.0
  %1016 = vmatpush2.msra.mxu0 0.0
  %1017 = vmatprep.subr.mxu0 0.0
  %1018 = vmatpush2.msra.mxu0 0.0
  %1019 = vmatprep.subr.mxu0 0.0
  %1020 = vmatpush2.msra.mxu0 0.0
  %1021 = vmatprep.mubr.f32.mxu0 0.0
  %1022 = vmatmul.mubr.f32.gmra.mxu0 %v955
  %v1023 = vpop.f32.mrf.mxu0
  %v1024 = vadd.f32 %v951, %v1023
  %v1025 = vpop.f32.mrf.mxu0
  %1026 = vdwg.mxu0
  %v1027 = vld [vmem:[%s9] sm:$0xff]
  %v1028 = vld [vmem:[%s9 + $0x8] sm:$0xff]
  %v1029 = vld [vmem:[%s9 + $0x10] sm:$0xff]
  %v1030 = vld [vmem:[%s9 + $0x18] sm:$0xff]
  %v1032 = vsel %vm101, %v72, 0
  %1034 = vmatprep.subr.mxu0 0.0
  %1035 = vmatpush1.msra.mxu0 0.0
  %1036 = vmatprep.subr.mxu0 0.0
  %1037 = vmatpush1.msra.mxu0 0.0
  %1038 = vmatprep.subr.mxu0 0.0
  %1039 = vmatpush1.msra.mxu0 0.0
  %1040 = vmatprep.subr.mxu0 0.0
  %1041 = vmatpush1.msra.mxu0 0.0
  %1042 = vmatprep.subr.mxu0 0.0
  %1043 = vmatpush1.msra.mxu0 0.0
  %1044 = vmatprep.subr.mxu0 0.0
  %1045 = vmatpush1.msra.mxu0 0.0
  %1046 = vmatprep.subr.mxu0 0.0
  %1047 = vmatpush1.msra.mxu0 0.0
  %1048 = vmatprep.subr.mxu0 0.0
  %1049 = vmatpush1.msra.mxu0 0.0
  %1050 = vmatprep.subr.mxu0 0.0
  %1051 = vmatpush1.msra.mxu0 0.0
  %1052 = vmatprep.subr.mxu0 0.0
  %1053 = vmatpush1.msra.mxu0 0.0
  %1054 = vmatprep.subr.mxu0 0.0
  %1055 = vmatpush1.msra.mxu0 0.0
  %1056 = vmatprep.subr.mxu0 0.0
  %1057 = vmatpush1.msra.mxu0 0.0
  %1058 = vmatprep.subr.mxu0 0.0
  %1059 = vmatpush1.msra.mxu0 %v1030
  %1060 = vmatprep.subr.mxu0 0.0
  %1061 = vmatpush1.msra.mxu0 %v1029
  %1062 = vmatprep.subr.mxu0 0.0
  %1063 = vmatpush1.msra.mxu0 %v1028
  %1064 = vmatprep.subr.mxu0 0.0
  %1065 = vmatpush1.msra.mxu0 %v1027
  %1066 = vmatprep.subr.mxu0 0.0
  %1067 = vmatpush2.msra.mxu0 0.0
  %1068 = vmatprep.subr.mxu0 0.0
  %1069 = vmatpush2.msra.mxu0 0.0
  %1070 = vmatprep.subr.mxu0 0.0
  %1071 = vmatpush2.msra.mxu0 0.0
  %1072 = vmatprep.subr.mxu0 0.0
  %1073 = vmatpush2.msra.mxu0 0.0
  %1074 = vmatprep.subr.mxu0 0.0
  %1075 = vmatpush2.msra.mxu0 0.0
  %1076 = vmatprep.subr.mxu0 0.0
  %1077 = vmatpush2.msra.mxu0 0.0
  %1078 = vmatprep.subr.mxu0 0.0
  %1079 = vmatpush2.msra.mxu0 0.0
  %1080 = vmatprep.subr.mxu0 0.0
  %1081 = vmatpush2.msra.mxu0 0.0
  %1082 = vmatprep.subr.mxu0 0.0
  %1083 = vmatpush2.msra.mxu0 0.0
  %1084 = vmatprep.subr.mxu0 0.0
  %1085 = vmatpush2.msra.mxu0 0.0
  %1086 = vmatprep.subr.mxu0 0.0
  %1087 = vmatpush2.msra.mxu0 0.0
  %1088 = vmatprep.subr.mxu0 0.0
  %1089 = vmatpush2.msra.mxu0 0.0
  %1090 = vmatprep.subr.mxu0 0.0
  %1091 = vmatpush2.msra.mxu0 0.0
  %1092 = vmatprep.subr.mxu0 0.0
  %1093 = vmatpush2.msra.mxu0 0.0
  %1094 = vmatprep.subr.mxu0 0.0
  %1095 = vmatpush2.msra.mxu0 0.0
  %1096 = vmatprep.subr.mxu0 0.0
  %1097 = vmatpush2.msra.mxu0 0.0
  %1098 = vmatprep.mubr.f32.mxu0 0.0
  %1099 = vmatmul.mubr.f32.gmra.mxu0 %v1032
  %v1100 = vpop.f32.mrf.mxu0
  %v1101 = vadd.f32 0.0, %v1100
  %v1102 = vpop.f32.mrf.mxu0
  %1103 = vdwg.mxu0
  %v1104 = vadd.f32 %v1024, %v1101
  %v1105 = vld [vmem:[%s10] sm:$0x1]
  %v1107 = vlaneseq
  %v1108 = vshrl.u32 %v1107, 7
  %v1109 = vsub.s32 0, %v1108
  %v1110 = vrot.slane %v1105, %v1109
  %v1112 = vadd.f32 %v1104, %v1110
  %v1113 = vxor.u32 %v1112, 2147483648
  %v1114 = vmul.f32 %v1113, 1.442695
  %v1115 = vpow.pop %v1114
  %v1116 = vadd.f32 %v1115, 1.0
  %v1117 = vrcp.pop %v1116
  %v1118 = vmul.f32 1.0, %v1117
  %1120 = vrot.lane.b32.xlu0 %v1112, 32
  %v1121 = vpop.permute.xlu0 %1120
  %v1123 = vmul.f32 %v1118, %v1121
  %1125 = vrot.lane.b32.xlu0 %v1123, 64
  %v1126 = vpop.permute.xlu0 %1125
  %v1128 = vadd.f32 %v1112, %v1126
  %v1129 = vtanh.pop %v1128
  %v1130 = vsub.f32 1.0, %v1118
  %1132 = vrot.lane.b32.xlu0 %v1129, 96
  %v1133 = vpop.permute.xlu0 %1132
  %v1135 = vmul.f32 %v1130, %v1133
  %1136 = vrot.lane.b32.xlu0 %v72, 32
  %v1137 = vpop.permute.xlu0 %1136
  %v1139 = vmul.f32 %v1118, %v1137
  %v1140 = vadd.f32 %v1135, %v1139
  %v1141 = vld [vmem:[%s11] sm:$0xff]
  %v1142 = vld [vmem:[%s11 + $0x8] sm:$0xff]
  %v1143 = vld [vmem:[%s11 + $0x10] sm:$0xff]
  %v1144 = vld [vmem:[%s11 + $0x18] sm:$0xff]
  %v1145 = vld [vmem:[%s12] sm:$0xff]
  %v1146 = vld [vmem:[%s12 + $0x8] sm:$0xff]
  %v1147 = vld [vmem:[%s12 + $0x10] sm:$0xff]
  %v1148 = vld [vmem:[%s12 + $0x18] sm:$0xff]
  %1149 = vmatprep.subr.mxu0 0.0
  %1150 = vmatpush1.msra.mxu0 0.0
  %1151 = vmatprep.subr.mxu0 0.0
  %1152 = vmatpush1.msra.mxu0 0.0
  %1153 = vmatprep.subr.mxu0 0.0
  %1154 = vmatpush1.msra.mxu0 0.0
  %1155 = vmatprep.subr.mxu0 0.0
  %1156 = vmatpush1.msra.mxu0 0.0
  %1157 = vmatprep.subr.mxu0 0.0
  %1158 = vmatpush1.msra.mxu0 0.0
  %1159 = vmatprep.subr.mxu0 0.0
  %1160 = vmatpush1.msra.mxu0 0.0
  %1161 = vmatprep.subr.mxu0 0.0
  %1162 = vmatpush1.msra.mxu0 0.0
  %1163 = vmatprep.subr.mxu0 0.0
  %1164 = vmatpush1.msra.mxu0 0.0
  %1165 = vmatprep.subr.mxu0 0.0
  %1166 = vmatpush1.msra.mxu0 0.0
  %1167 = vmatprep.subr.mxu0 0.0
  %1168 = vmatpush1.msra.mxu0 0.0
  %1169 = vmatprep.subr.mxu0 0.0
  %1170 = vmatpush1.msra.mxu0 0.0
  %1171 = vmatprep.subr.mxu0 0.0
  %1172 = vmatpush1.msra.mxu0 0.0
  %1173 = vmatprep.subr.mxu0 0.0
  %1174 = vmatpush1.msra.mxu0 %v1148
  %1175 = vmatprep.subr.mxu0 0.0
  %1176 = vmatpush1.msra.mxu0 %v1147
  %1177 = vmatprep.subr.mxu0 0.0
  %1178 = vmatpush1.msra.mxu0 %v1146
  %1179 = vmatprep.subr.mxu0 0.0
  %1180 = vmatpush1.msra.mxu0 %v1145
  %1181 = vmatprep.subr.mxu0 0.0
  %1182 = vmatpush2.msra.mxu0 0.0
  %1183 = vmatprep.subr.mxu0 0.0
  %1184 = vmatpush2.msra.mxu0 0.0
  %1185 = vmatprep.subr.mxu0 0.0
  %1186 = vmatpush2.msra.mxu0 0.0
  %1187 = vmatprep.subr.mxu0 0.0
  %1188 = vmatpush2.msra.mxu0 0.0
  %1189 = vmatprep.subr.mxu0 0.0
  %1190 = vmatpush2.msra.mxu0 0.0
  %1191 = vmatprep.subr.mxu0 0.0
  %1192 = vmatpush2.msra.mxu0 0.0
  %1193 = vmatprep.subr.mxu0 0.0
  %1194 = vmatpush2.msra.mxu0 0.0
  %1195 = vmatprep.subr.mxu0 0.0
  %1196 = vmatpush2.msra.mxu0 0.0
  %1197 = vmatprep.subr.mxu0 0.0
  %1198 = vmatpush2.msra.mxu0 0.0
  %1199 = vmatprep.subr.mxu0 0.0
  %1200 = vmatpush2.msra.mxu0 0.0
  %1201 = vmatprep.subr.mxu0 0.0
  %1202 = vmatpush2.msra.mxu0 0.0
  %1203 = vmatprep.subr.mxu0 0.0
  %1204 = vmatpush2.msra.mxu0 0.0
  %1205 = vmatprep.subr.mxu0 0.0
  %1206 = vmatpush2.msra.mxu0 0.0
  %1207 = vmatprep.subr.mxu0 0.0
  %1208 = vmatpush2.msra.mxu0 0.0
  %1209 = vmatprep.subr.mxu0 0.0
  %1210 = vmatpush2.msra.mxu0 0.0
  %1211 = vmatprep.subr.mxu0 0.0
  %1212 = vmatpush2.msra.mxu0 0.0
  %1213 = vmatprep.mubr.f32.mxu0 0.0
  %1214 = vmatmul.mubr.f32.gmra.mxu0 %v103
  %v1215 = vpop.f32.mrf.mxu0
  %v1216 = vadd.f32 0.0, %v1215
  %v1217 = vpop.f32.mrf.mxu0
  %1218 = vdwg.mxu0
  %1220 = vrot.lane.b32.xlu0 %v1140, 96
  %v1221 = vpop.permute.xlu0 %1220
  %v1222 = vsel %vm101, %v1221, 0
  %1224 = vmatprep.subr.mxu0 0.0
  %1225 = vmatpush1.msra.mxu0 0.0
  %1226 = vmatprep.subr.mxu0 0.0
  %1227 = vmatpush1.msra.mxu0 0.0
  %1228 = vmatprep.subr.mxu0 0.0
  %1229 = vmatpush1.msra.mxu0 0.0
  %1230 = vmatprep.subr.mxu0 0.0
  %1231 = vmatpush1.msra.mxu0 0.0
  %1232 = vmatprep.subr.mxu0 0.0
  %1233 = vmatpush1.msra.mxu0 0.0
  %1234 = vmatprep.subr.mxu0 0.0
  %1235 = vmatpush1.msra.mxu0 0.0
  %1236 = vmatprep.subr.mxu0 0.0
  %1237 = vmatpush1.msra.mxu0 0.0
  %1238 = vmatprep.subr.mxu0 0.0
  %1239 = vmatpush1.msra.mxu0 0.0
  %1240 = vmatprep.subr.mxu0 0.0
  %1241 = vmatpush1.msra.mxu0 0.0
  %1242 = vmatprep.subr.mxu0 0.0
  %1243 = vmatpush1.msra.mxu0 0.0
  %1244 = vmatprep.subr.mxu0 0.0
  %1245 = vmatpush1.msra.mxu0 0.0
  %1246 = vmatprep.subr.mxu0 0.0
  %1247 = vmatpush1.msra.mxu0 0.0
  %1248 = vmatprep.subr.mxu0 0.0
  %1249 = vmatpush1.msra.mxu0 %v1144
  %1250 = vmatprep.subr.mxu0 0.0
  %1251 = vmatpush1.msra.mxu0 %v1143
  %1252 = vmatprep.subr.mxu0 0.0
  %1253 = vmatpush1.msra.mxu0 %v1142
  %1254 = vmatprep.subr.mxu0 0.0
  %1255 = vmatpush1.msra.mxu0 %v1141
  %1256 = vmatprep.subr.mxu0 0.0
  %1257 = vmatpush2.msra.mxu0 0.0
  %1258 = vmatprep.subr.mxu0 0.0
  %1259 = vmatpush2.msra.mxu0 0.0
  %1260 = vmatprep.subr.mxu0 0.0
  %1261 = vmatpush2.msra.mxu0 0.0
  %1262 = vmatprep.subr.mxu0 0.0
  %1263 = vmatpush2.msra.mxu0 0.0
  %1264 = vmatprep.subr.mxu0 0.0
  %1265 = vmatpush2.msra.mxu0 0.0
  %1266 = vmatprep.subr.mxu0 0.0
  %1267 = vmatpush2.msra.mxu0 0.0
  %1268 = vmatprep.subr.mxu0 0.0
  %1269 = vmatpush2.msra.mxu0 0.0
  %1270 = vmatprep.subr.mxu0 0.0
  %1271 = vmatpush2.msra.mxu0 0.0
  %1272 = vmatprep.subr.mxu0 0.0
  %1273 = vmatpush2.msra.mxu0 0.0
  %1274 = vmatprep.subr.mxu0 0.0
  %1275 = vmatpush2.msra.mxu0 0.0
  %1276 = vmatprep.subr.mxu0 0.0
  %1277 = vmatpush2.msra.mxu0 0.0
  %1278 = vmatprep.subr.mxu0 0.0
  %1279 = vmatpush2.msra.mxu0 0.0
  %1280 = vmatprep.subr.mxu0 0.0
  %1281 = vmatpush2.msra.mxu0 0.0
  %1282 = vmatprep.subr.mxu0 0.0
  %1283 = vmatpush2.msra.mxu0 0.0
  %1284 = vmatprep.subr.mxu0 0.0
  %1285 = vmatpush2.msra.mxu0 0.0
  %1286 = vmatprep.subr.mxu0 0.0
  %1287 = vmatpush2.msra.mxu0 0.0
  %1288 = vmatprep.mubr.f32.mxu0 0.0
  %1289 = vmatmul.mubr.f32.gmra.mxu0 %v1222
  %v1290 = vpop.f32.mrf.mxu0
  %v1291 = vadd.f32 %v1216, %v1290
  %v1292 = vpop.f32.mrf.mxu0
  %1293 = vdwg.mxu0
  %v1294 = vld [vmem:[%s13] sm:$0x1]
  %v1296 = vlaneseq
  %v1297 = vshrl.u32 %v1296, 7
  %v1298 = vsub.s32 0, %v1297
  %v1299 = vrot.slane %v1294, %v1298
  %v1301 = vadd.f32 %v1291, %v1299
  %v1302 = vxor.u32 %v1301, 2147483648
  %v1303 = vmul.f32 %v1302, 1.442695
  %v1304 = vpow.pop %v1303
  %v1305 = vadd.f32 %v1304, 1.0
  %v1306 = vrcp.pop %v1305
  %v1307 = vmul.f32 1.0, %v1306
  %1309 = vrot.lane.b32.xlu0 %v1301, 32
  %v1310 = vpop.permute.xlu0 %1309
  %v1312 = vmul.f32 %v1307, %v1310
  %1314 = vrot.lane.b32.xlu0 %v1312, 64
  %v1315 = vpop.permute.xlu0 %1314
  %v1317 = vadd.f32 %v1301, %v1315
  %v1318 = vtanh.pop %v1317
  %v1319 = vsub.f32 1.0, %v1307
  %1321 = vrot.lane.b32.xlu0 %v1318, 96
  %v1322 = vpop.permute.xlu0 %1321
  %v1324 = vmul.f32 %v1319, %v1322
  %1325 = vrot.lane.b32.xlu0 %v74, 32
  %v1326 = vpop.permute.xlu0 %1325
  %v1328 = vmul.f32 %v1307, %v1326
  %v1329 = vadd.f32 %v1324, %v1328
  %1331 = vst.msk [vmem:[#allocation2] sm:$0x3] %vm871, %v1221
  %1333 = vrot.lane.b32.xlu0 %v1329, 96
  %v1334 = vpop.permute.xlu0 %1333
  %1336 = vst.msk [vmem:[%s73] sm:$0x3] %vm871, %v1334
  %1337 = vst.msk [vmem:[%s18 + $0x2] sm:$0x3] %vm871, %v1221
  %1338 = vst.msk [vmem:[%s18 + $0x4] sm:$0x3] %vm871, %v1334
  %v1339 = vld [vmem:[%s14] sm:$0xff]
  %v1340 = vld [vmem:[%s14 + $0x8] sm:$0xff]
  %v1341 = vld [vmem:[%s14 + $0x10] sm:$0xff]
  %v1342 = vld [vmem:[%s14 + $0x18] sm:$0xff]
  %v1343 = vld [vmem:[%s15] sm:$0xff]
  %v1344 = vld [vmem:[%s15 + $0x8] sm:$0xff]
  %v1345 = vld [vmem:[%s15 + $0x10] sm:$0xff]
  %v1346 = vld [vmem:[%s15 + $0x18] sm:$0xff]
  %v1347 = vsel %vm101, %v1334, 0
  %1349 = vmatprep.subr.mxu0 0.0
  %1350 = vmatpush1.msra.mxu0 0.0
  %1351 = vmatprep.subr.mxu0 0.0
  %1352 = vmatpush1.msra.mxu0 0.0
  %1353 = vmatprep.subr.mxu0 0.0
  %1354 = vmatpush1.msra.mxu0 0.0
  %1355 = vmatprep.subr.mxu0 0.0
  %1356 = vmatpush1.msra.mxu0 0.0
  %1357 = vmatprep.subr.mxu0 0.0
  %1358 = vmatpush1.msra.mxu0 0.0
  %1359 = vmatprep.subr.mxu0 0.0
  %1360 = vmatpush1.msra.mxu0 0.0
  %1361 = vmatprep.subr.mxu0 0.0
  %1362 = vmatpush1.msra.mxu0 0.0
  %1363 = vmatprep.subr.mxu0 0.0
  %1364 = vmatpush1.msra.mxu0 0.0
  %1365 = vmatprep.subr.mxu0 0.0
  %1366 = vmatpush1.msra.mxu0 0.0
  %1367 = vmatprep.subr.mxu0 0.0
  %1368 = vmatpush1.msra.mxu0 0.0
  %1369 = vmatprep.subr.mxu0 0.0
  %1370 = vmatpush1.msra.mxu0 0.0
  %1371 = vmatprep.subr.mxu0 0.0
  %1372 = vmatpush1.msra.mxu0 0.0
  %1373 = vmatprep.subr.mxu0 0.0
  %1374 = vmatpush1.msra.mxu0 %v1346
  %1375 = vmatprep.subr.mxu0 0.0
  %1376 = vmatpush1.msra.mxu0 %v1345
  %1377 = vmatprep.subr.mxu0 0.0
  %1378 = vmatpush1.msra.mxu0 %v1344
  %1379 = vmatprep.subr.mxu0 0.0
  %1380 = vmatpush1.msra.mxu0 %v1343
  %1381 = vmatprep.subr.mxu0 0.0
  %1382 = vmatpush2.msra.mxu0 0.0
  %1383 = vmatprep.subr.mxu0 0.0
  %1384 = vmatpush2.msra.mxu0 0.0
  %1385 = vmatprep.subr.mxu0 0.0
  %1386 = vmatpush2.msra.mxu0 0.0
  %1387 = vmatprep.subr.mxu0 0.0
  %1388 = vmatpush2.msra.mxu0 0.0
  %1389 = vmatprep.subr.mxu0 0.0
  %1390 = vmatpush2.msra.mxu0 0.0
  %1391 = vmatprep.subr.mxu0 0.0
  %1392 = vmatpush2.msra.mxu0 0.0
  %1393 = vmatprep.subr.mxu0 0.0
  %1394 = vmatpush2.msra.mxu0 0.0
  %1395 = vmatprep.subr.mxu0 0.0
  %1396 = vmatpush2.msra.mxu0 0.0
  %1397 = vmatprep.subr.mxu0 0.0
  %1398 = vmatpush2.msra.mxu0 0.0
  %1399 = vmatprep.subr.mxu0 0.0
  %1400 = vmatpush2.msra.mxu0 0.0
  %1401 = vmatprep.subr.mxu0 0.0
  %1402 = vmatpush2.msra.mxu0 0.0
  %1403 = vmatprep.subr.mxu0 0.0
  %1404 = vmatpush2.msra.mxu0 0.0
  %1405 = vmatprep.subr.mxu0 0.0
  %1406 = vmatpush2.msra.mxu0 0.0
  %1407 = vmatprep.subr.mxu0 0.0
  %1408 = vmatpush2.msra.mxu0 0.0
  %1409 = vmatprep.subr.mxu0 0.0
  %1410 = vmatpush2.msra.mxu0 0.0
  %1411 = vmatprep.subr.mxu0 0.0
  %1412 = vmatpush2.msra.mxu0 0.0
  %1413 = vmatprep.mubr.f32.mxu0 0.0
  %1414 = vmatmul.mubr.f32.gmra.mxu0 %v1347
  %v1415 = vpop.f32.mrf.mxu0
  %v1416 = vadd.f32 0.0, %v1415
  %v1417 = vpop.f32.mrf.mxu0
  %1418 = vdwg.mxu0
  %1419 = vmatprep.subr.mxu0 0.0
  %1420 = vmatpush1.msra.mxu0 0.0
  %1421 = vmatprep.subr.mxu0 0.0
  %1422 = vmatpush1.msra.mxu0 0.0
  %1423 = vmatprep.subr.mxu0 0.0
  %1424 = vmatpush1.msra.mxu0 0.0
  %1425 = vmatprep.subr.mxu0 0.0
  %1426 = vmatpush1.msra.mxu0 0.0
  %1427 = vmatprep.subr.mxu0 0.0
  %1428 = vmatpush1.msra.mxu0 0.0
  %1429 = vmatprep.subr.mxu0 0.0
  %1430 = vmatpush1.msra.mxu0 0.0
  %1431 = vmatprep.subr.mxu0 0.0
  %1432 = vmatpush1.msra.mxu0 0.0
  %1433 = vmatprep.subr.mxu0 0.0
  %1434 = vmatpush1.msra.mxu0 0.0
  %1435 = vmatprep.subr.mxu0 0.0
  %1436 = vmatpush1.msra.mxu0 0.0
  %1437 = vmatprep.subr.mxu0 0.0
  %1438 = vmatpush1.msra.mxu0 0.0
  %1439 = vmatprep.subr.mxu0 0.0
  %1440 = vmatpush1.msra.mxu0 0.0
  %1441 = vmatprep.subr.mxu0 0.0
  %1442 = vmatpush1.msra.mxu0 0.0
  %1443 = vmatprep.subr.mxu0 0.0
  %1444 = vmatpush1.msra.mxu0 %v1342
  %1445 = vmatprep.subr.mxu0 0.0
  %1446 = vmatpush1.msra.mxu0 %v1341
  %1447 = vmatprep.subr.mxu0 0.0
  %1448 = vmatpush1.msra.mxu0 %v1340
  %1449 = vmatprep.subr.mxu0 0.0
  %1450 = vmatpush1.msra.mxu0 %v1339
  %1451 = vmatprep.subr.mxu0 0.0
  %1452 = vmatpush2.msra.mxu0 0.0
  %1453 = vmatprep.subr.mxu0 0.0
  %1454 = vmatpush2.msra.mxu0 0.0
  %1455 = vmatprep.subr.mxu0 0.0
  %1456 = vmatpush2.msra.mxu0 0.0
  %1457 = vmatprep.subr.mxu0 0.0
  %1458 = vmatpush2.msra.mxu0 0.0
  %1459 = vmatprep.subr.mxu0 0.0
  %1460 = vmatpush2.msra.mxu0 0.0
  %1461 = vmatprep.subr.mxu0 0.0
  %1462 = vmatpush2.msra.mxu0 0.0
  %1463 = vmatprep.subr.mxu0 0.0
  %1464 = vmatpush2.msra.mxu0 0.0
  %1465 = vmatprep.subr.mxu0 0.0
  %1466 = vmatpush2.msra.mxu0 0.0
  %1467 = vmatprep.subr.mxu0 0.0
  %1468 = vmatpush2.msra.mxu0 0.0
  %1469 = vmatprep.subr.mxu0 0.0
  %1470 = vmatpush2.msra.mxu0 0.0
  %1471 = vmatprep.subr.mxu0 0.0
  %1472 = vmatpush2.msra.mxu0 0.0
  %1473 = vmatprep.subr.mxu0 0.0
  %1474 = vmatpush2.msra.mxu0 0.0
  %1475 = vmatprep.subr.mxu0 0.0
  %1476 = vmatpush2.msra.mxu0 0.0
  %1477 = vmatprep.subr.mxu0 0.0
  %1478 = vmatpush2.msra.mxu0 0.0
  %1479 = vmatprep.subr.mxu0 0.0
  %1480 = vmatpush2.msra.mxu0 0.0
  %1481 = vmatprep.subr.mxu0 0.0
  %1482 = vmatpush2.msra.mxu0 0.0
  %1483 = vmatprep.mubr.f32.mxu0 0.0
  %1484 = vmatmul.mubr.f32.gmra.mxu0 %v955
  %v1485 = vpop.f32.mrf.mxu0
  %v1486 = vadd.f32 %v1416, %v1485
  %v1487 = vpop.f32.mrf.mxu0
  %1488 = vdwg.mxu0
  %v1489 = vld [vmem:[%s16] sm:$0xff]
  %v1490 = vld [vmem:[%s16 + $0x8] sm:$0xff]
  %v1491 = vld [vmem:[%s16 + $0x10] sm:$0xff]
  %v1492 = vld [vmem:[%s16 + $0x18] sm:$0xff]
  %1493 = vmatprep.subr.mxu0 0.0
  %1494 = vmatpush1.msra.mxu0 0.0
  %1495 = vmatprep.subr.mxu0 0.0
  %1496 = vmatpush1.msra.mxu0 0.0
  %1497 = vmatprep.subr.mxu0 0.0
  %1498 = vmatpush1.msra.mxu0 0.0
  %1499 = vmatprep.subr.mxu0 0.0
  %1500 = vmatpush1.msra.mxu0 0.0
  %1501 = vmatprep.subr.mxu0 0.0
  %1502 = vmatpush1.msra.mxu0 0.0
  %1503 = vmatprep.subr.mxu0 0.0
  %1504 = vmatpush1.msra.mxu0 0.0
  %1505 = vmatprep.subr.mxu0 0.0
  %1506 = vmatpush1.msra.mxu0 0.0
  %1507 = vmatprep.subr.mxu0 0.0
  %1508 = vmatpush1.msra.mxu0 0.0
  %1509 = vmatprep.subr.mxu0 0.0
  %1510 = vmatpush1.msra.mxu0 0.0
  %1511 = vmatprep.subr.mxu0 0.0
  %1512 = vmatpush1.msra.mxu0 0.0
  %1513 = vmatprep.subr.mxu0 0.0
  %1514 = vmatpush1.msra.mxu0 0.0
  %1515 = vmatprep.subr.mxu0 0.0
  %1516 = vmatpush1.msra.mxu0 0.0
  %1517 = vmatprep.subr.mxu0 0.0
  %1518 = vmatpush1.msra.mxu0 %v1492
  %1519 = vmatprep.subr.mxu0 0.0
  %1520 = vmatpush1.msra.mxu0 %v1491
  %1521 = vmatprep.subr.mxu0 0.0
  %1522 = vmatpush1.msra.mxu0 %v1490
  %1523 = vmatprep.subr.mxu0 0.0
  %1524 = vmatpush1.msra.mxu0 %v1489
  %1525 = vmatprep.subr.mxu0 0.0
  %1526 = vmatpush2.msra.mxu0 0.0
  %1527 = vmatprep.subr.mxu0 0.0
  %1528 = vmatpush2.msra.mxu0 0.0
  %1529 = vmatprep.subr.mxu0 0.0
  %1530 = vmatpush2.msra.mxu0 0.0
  %1531 = vmatprep.subr.mxu0 0.0
  %1532 = vmatpush2.msra.mxu0 0.0
  %1533 = vmatprep.subr.mxu0 0.0
  %1534 = vmatpush2.msra.mxu0 0.0
  %1535 = vmatprep.subr.mxu0 0.0
  %1536 = vmatpush2.msra.mxu0 0.0
  %1537 = vmatprep.subr.mxu0 0.0
  %1538 = vmatpush2.msra.mxu0 0.0
  %1539 = vmatprep.subr.mxu0 0.0
  %1540 = vmatpush2.msra.mxu0 0.0
  %1541 = vmatprep.subr.mxu0 0.0
  %1542 = vmatpush2.msra.mxu0 0.0
  %1543 = vmatprep.subr.mxu0 0.0
  %1544 = vmatpush2.msra.mxu0 0.0
  %1545 = vmatprep.subr.mxu0 0.0
  %1546 = vmatpush2.msra.mxu0 0.0
  %1547 = vmatprep.subr.mxu0 0.0
  %1548 = vmatpush2.msra.mxu0 0.0
  %1549 = vmatprep.subr.mxu0 0.0
  %1550 = vmatpush2.msra.mxu0 0.0
  %1551 = vmatprep.subr.mxu0 0.0
  %1552 = vmatpush2.msra.mxu0 0.0
  %1553 = vmatprep.subr.mxu0 0.0
  %1554 = vmatpush2.msra.mxu0 0.0
  %1555 = vmatprep.subr.mxu0 0.0
  %1556 = vmatpush2.msra.mxu0 0.0
  %1557 = vmatprep.mubr.f32.mxu0 0.0
  %1558 = vmatmul.mubr.f32.gmra.mxu0 %v882
  %v1559 = vpop.f32.mrf.mxu0
  %v1560 = vadd.f32 0.0, %v1559
  %v1561 = vpop.f32.mrf.mxu0
  %1562 = vdwg.mxu0
  %v1563 = vadd.f32 %v1486, %v1560
  %v1564 = vld [vmem:[%s17] sm:$0x1]
  %v1566 = vlaneseq
  %v1567 = vshrl.u32 %v1566, 7
  %v1568 = vsub.s32 0, %v1567
  %v1569 = vrot.slane %v1564, %v1568
  %v1571 = vadd.f32 %v1563, %v1569
  %v1572 = vxor.u32 %v1571, 2147483648
  %v1573 = vmul.f32 %v1572, 1.442695
  %v1574 = vpow.pop %v1573
  %v1575 = vadd.f32 %v1574, 1.0
  %v1576 = vrcp.pop %v1575
  %v1577 = vmul.f32 1.0, %v1576
  %vm1578 = vcmask 517120
  %v1579 = vsel %vm1578, %v1571, -inf
  %1580 = vmax.xlane.f32.xlu0 %v1579
  %v1581 = vpop.xlane.xlu0 %1580
  %v1582 = vsub.f32 %v1571, %v1581
  %v1583 = vmul.f32 %v1582, 1.442695
  %v1584 = vpow.pop %v1583
  %v1585 = vsel %vm1578, %v1584, 0.0
  %1586 = vadd.xlane.f32.xlu0 %v1585
  %v1587 = vpop.xlane.xlu0 %1586
  %v1588 = vlog2.pop %v1587
  %v1589 = vmul.f32 %v1588, 0.6931472
  %v1590 = vsub.f32 %v1582, %v1589
  %v1591 = vlog2.pop %v1577
  %v1592 = vmul.f32 %v1591, 0.6931472
  %1594 = vset.pattern.permute.xlu0 64
  %1595 = vperm.xlu0 %1594, %v1592
  %v1596 = vpop.permute.xlu0 %1595
  %v1598 = vadd.f32 %v1590, %v1596
  %1599 = vst.msk [vmem:[%s18] sm:$0x3] %vm1578, %v1598
  %vm1600 = vcmask 525824
  %1601 = vst.msk [vmem:[%s18] sm:$0x3] %vm1600, %v1577
  // Predicated region
  $region74: #{local_attn_decoder.1} parent=0 // pred_check
    _
  $region75: #{local_attn_decoder.1} parent=0 // pred_check_branch
    %1603 = sbr.rel (0) target = $region77
  $region76: #{local_attn_decoder.1} parent=0 // pred_region
    _
  $region77: #{local_attn_decoder.1} parent=0 // pred_fallthru
    _
  // Predicated region
  $region78: #{local_attn_decoder.1} parent=0 // pred_check
    _
  $region79: #{local_attn_decoder.1} parent=0 // pred_check_branch
    %1605 = sbr.rel (0) target = $region81
  $region80: #{local_attn_decoder.1} parent=0 // pred_region
    _
  $region81: #{local_attn_decoder.1} parent=0 // pred_fallthru
    _

</llo_original>
